<compile_context>
chip_gen: v7x
topology: tpu7x:2x2x1
jax: 0.10.0
libtpu: 0.0.40
codegen_flags: <defaults>
</compile_context>

<pallas_src>
import functools

import jax
import jax.numpy as jnp
from jax import lax
from jax.experimental import pallas as pl
from jax.experimental.pallas import tpu as pltpu


# ------------------------- fused Pallas kernel -------------------------

def _dense_layer_kernel(x_ref, s1_ref, b1_ref, w1_ref, b2_ref, w2_ref,
                        o_ref, yp_ref, *, H):
    """Fused bn1 -> relu1 -> conv1(1x1) -> bn2 -> relu2 -> conv2(3x3, pad=1).

    Lane-fused layouts (W and channels merged into the lane dimension):
      x_ref : (1, H, W*Cin)  f32      one image
      s1/b1 : (1, W*Cin)     f32      folded BN1 scale / shift, tiled over W
      w1    : (W*Cin, W*Cmid) bf16    block-diagonal 1x1 weight, bn2 scale folded in
      b2    : (1, W*Cmid)    f32      BN2 shift, tiled over W
      w2    : (3, W*Cmid, W*Cout) bf16 banded 3x3 weight per dh (dw taps + W-pad folded in)
      o_ref : (1, H, W*Cout) f32      lane-dense output (W*Cout is a multiple of 128 here)
      yp_ref: (H+2, W*Cmid)  f32      VMEM scratch; rows 0 and H+1 are the zero H-halo
    """
    WCmid = yp_ref.shape[1]

    # bn1 + relu1 (VPU, f32)
    x = x_ref[0]                                                    # (H, W*Cin)
    h = jnp.maximum(x * s1_ref[0] + b1_ref[0], 0.0)

    # conv1 (1x1, bn2 scale folded into the weight): bf16 MXU, f32 accumulation
    y = jnp.dot(h.astype(jnp.bfloat16), w1_ref[...],
                preferred_element_type=jnp.float32)                 # (H, W*Cmid)
    y = jnp.maximum(y + b2_ref[0], 0.0)                             # + b2, relu2
    y_bf = y.astype(jnp.bfloat16)

    # dh=1 (center) tap straight from vregs -- no VMEM round trip
    acc = jnp.dot(y_bf, w2_ref[1], preferred_element_type=jnp.float32)

    # zero ONLY the two halo rows, then drop the interior into the scratch
    zero_row = jnp.zeros((1, WCmid), yp_ref.dtype)
    yp_ref[pl.ds(0, 1), :] = zero_row
    yp_ref[pl.ds(H + 1, 1), :] = zero_row
    yp_ref[pl.ds(1, H), :] = y

    # dh=0 / dh=2 taps via zero-cost static sublane slices of the padded scratch;
    # dw shifts + W zero-padding live inside the banded w2 matrices.
    acc = acc + jnp.dot(yp_ref[pl.ds(0, H), :].astype(jnp.bfloat16), w2_ref[0],
                        preferred_element_type=jnp.float32)
    acc = acc + jnp.dot(yp_ref[pl.ds(2, H), :].astype(jnp.bfloat16), w2_ref[2],
                        preferred_element_type=jnp.float32)

    o_ref[0] = acc.astype(o_ref.dtype)


# ------------------------- parameter prep (run ONCE) -------------------------

def _fold_bn(gamma, beta, mean, var, eps=1e-5):
    scale = gamma / jnp.sqrt(var + eps)
    shift = beta - mean * scale
    return scale, shift


def prepare_dense_layer_params(params, H, W, eps=1e-5):
    """One-time weight/BN expansion.  Call once at parameter-prep time; the returned
    arrays are what the per-step forward consumes (no per-call kron / tile / band build)."""
    del H  # height does not enter the fused weights
    w1 = params["conv1_w"]            # (Cmid, Cin, 1, 1)  PyTorch layout
    w2 = params["conv2_w"]            # (Cout, Cmid, 3, 3) PyTorch layout
    C_in = w1.shape[1]
    Cmid = w1.shape[0]
    Cout = w2.shape[0]
    f32 = jnp.float32

    s1, b1 = _fold_bn(params["bn1_gamma"], params["bn1_beta"],
                      params["bn1_mean"], params["bn1_var"], eps)
    s2, b2 = _fold_bn(params["bn2_gamma"], params["bn2_beta"],
                      params["bn2_mean"], params["bn2_var"], eps)

    # BN vectors tiled over the fused W*C lane dimension (lane index = w*C + c)
    s1f = jnp.tile(s1, W).reshape(1, W * C_in).astype(f32)
    b1f = jnp.tile(b1, W).reshape(1, W * C_in).astype(f32)
    b2f = jnp.tile(b2, W).reshape(1, W * Cmid).astype(f32)

    # 1x1 conv weight with bn2 scale folded in; block-diagonal over the fused W axis.
    # Stored in bf16 (MXU-native, halves the weight DMA).
    w1m = jnp.transpose(w1[:, :, 0, 0], (1, 0)) * s2[None, :]       # (Cin, Cmid)
    w1big = jnp.kron(jnp.eye(W, dtype=f32), w1m).astype(jnp.bfloat16)  # (W*Cin, W*Cmid)

    # 3x3 conv: per-dh banded matrices over fused lanes; dw shift and W zero-padding are
    # encoded by shifted identities (out-of-range columns simply vanish).  bf16 storage.
    w2_hwio = jnp.transpose(w2, (2, 3, 1, 0)).astype(f32)            # (3, 3, Cmid, Cout)
    bands = []
    for dh in range(3):
        band = jnp.zeros((W * Cmid, W * Cout), f32)
        for dw in range(3):
            shift = jnp.eye(W, k=1 - dw, dtype=f32)                  # src col = out col + dw - 1
            band = band + jnp.kron(shift, w2_hwio[dh, dw])
        bands.append(band)
    w2band = jnp.stack(bands, axis=0).astype(jnp.bfloat16)           # (3, W*Cmid, W*Cout)

    return {"s1f": s1f, "b1f": b1f, "b2f": b2f, "w1big": w1big, "w2band": w2band}


# ------------------------- forward (per-step) -------------------------

@jax.jit
def dense_layer_forward(x_nchw, fused):
    """x_nchw: (N, Cin, H, W) float32; fused: output of prepare_dense_layer_params.
    Returns new_features (N, growth_rate, H, W) float32."""
    N, C_in, H, W = x_nchw.shape
    WCin = W * C_in
    WCmid = fused["w2band"].shape[1]
    WCout = fused["w2band"].shape[2]
    Cout = WCout // W

    # activations: NCHW -> NHWC -> (N, H, W*Cin), W and C fused into lanes
    x = jnp.transpose(x_nchw, (0, 2, 3, 1)).reshape(N, H, WCin)

    out_fused = pl.pallas_call(
        functools.partial(_dense_layer_kernel, H=H),
        out_shape=jax.ShapeDtypeStruct((N, H, WCout), jnp.float32),
        grid_spec=pltpu.PrefetchScalarGridSpec(
            num_scalar_prefetch=0,
            grid=(N,),
            in_specs=[
                pl.BlockSpec((1, H, WCin), lambda n: (n, 0, 0)),
                pl.BlockSpec((1, WCin), lambda n: (0, 0)),
                pl.BlockSpec((1, WCin), lambda n: (0, 0)),
                pl.BlockSpec((WCin, WCmid), lambda n: (0, 0)),
                pl.BlockSpec((1, WCmid), lambda n: (0, 0)),
                pl.BlockSpec((3, WCmid, WCout), lambda n: (0, 0, 0)),
            ],
            out_specs=pl.BlockSpec((1, H, WCout), lambda n: (n, 0, 0)),
            scratch_shapes=[pltpu.VMEM((H + 2, WCmid), jnp.float32)],
        ),
        compiler_params=pltpu.CompilerParams(dimension_semantics=("parallel",)),
    )(x, fused["s1f"], fused["b1f"], fused["w1big"], fused["b2f"], fused["w2band"])

    # (N, H, W*Cout) -> NHWC -> NCHW (PyTorch output convention)
    out_nhwc = out_fused.reshape(N, H, W, Cout)
    return jnp.transpose(out_nhwc, (0, 3, 1, 2))


# ------------------------- pure-JAX reference -------------------------

def dense_layer_reference(x_nchw, params, eps=1e-5):
    x = jnp.transpose(x_nchw, (0, 2, 3, 1))  # NHWC
    s1, b1 = _fold_bn(params["bn1_gamma"], params["bn1_beta"],
                      params["bn1_mean"], params["bn1_var"], eps)
    s2, b2 = _fold_bn(params["bn2_gamma"], params["bn2_beta"],
                      params["bn2_mean"], params["bn2_var"], eps)
    h = jnp.maximum(x * s1 + b1, 0.0)
    w1 = jnp.transpose(params["conv1_w"], (2, 3, 1, 0))  # HWIO
    y = lax.conv_general_dilated(h, w1, (1, 1), "VALID",
                                 dimension_numbers=("NHWC", "HWIO", "NHWC"))
    y = jnp.maximum(y * s2 + b2, 0.0)
    w2 = jnp.transpose(params["conv2_w"], (2, 3, 1, 0))  # HWIO
    out = lax.conv_general_dilated(y, w2, (1, 1), ((1, 1), (1, 1)),
                                   dimension_numbers=("NHWC", "HWIO", "NHWC"))
    return jnp.transpose(out, (0, 3, 1, 2))


# ------------------------- main -------------------------

if __name__ == "__main__":
    # module hyperparameters (small, synthetic)
    num_input_features = 12
    growth_rate = 8
    bn_size = 4
    C_mid = bn_size * growth_rate  # 32

    N, H, W = 2, 16, 16

    key = jax.random.PRNGKey(0)
    keys = jax.random.split(key, 12)

    x = jax.random.normal(keys[0], (N, num_input_features, H, W), jnp.float32)

    params = {
        # BatchNorm2d(num_input_features)
        "bn1_gamma": 1.0 + 0.1 * jax.random.normal(keys[1], (num_input_features,), jnp.float32),
        "bn1_beta": 0.1 * jax.random.normal(keys[2], (num_input_features,), jnp.float32),
        "bn1_mean": 0.1 * jax.random.normal(keys[3], (num_input_features,), jnp.float32),
        "bn1_var": jnp.abs(jax.random.normal(keys[4], (num_input_features,), jnp.float32)) + 0.5,
        # Conv2d(num_input_features, bn_size*growth_rate, 1, bias=False)
        "conv1_w": 0.1 * jax.random.normal(keys[5], (C_mid, num_input_features, 1, 1), jnp.float32),
        # BatchNorm2d(bn_size*growth_rate)
        "bn2_gamma": 1.0 + 0.1 * jax.random.normal(keys[6], (C_mid,), jnp.float32),
        "bn2_beta": 0.1 * jax.random.normal(keys[7], (C_mid,), jnp.float32),
        "bn2_mean": 0.1 * jax.random.normal(keys[8], (C_mid,), jnp.float32),
        "bn2_var": jnp.abs(jax.random.normal(keys[9], (C_mid,), jnp.float32)) + 0.5,
        # Conv2d(bn_size*growth_rate, growth_rate, 3, padding=1, bias=False)
        "conv2_w": 0.1 * jax.random.normal(keys[10], (growth_rate, C_mid, 3, 3), jnp.float32),
    }

    # one-time weight expansion (kept out of the per-step forward path)
    fused = prepare_dense_layer_params(params, H, W)
    fused = jax.tree_util.tree_map(jax.block_until_ready, fused)

    out = dense_layer_forward(x, fused)
    out = jax.block_until_ready(out)

    ref = dense_layer_reference(x, params)
    assert out.shape == (N, growth_rate, H, W), out.shape
    # bf16 MXU matmuls vs. f32 reference: loosened tolerance (expected precision change).
    assert jnp.allclose(out, ref, atol=5e-2, rtol=5e-2), \
        f"max abs err = {jnp.max(jnp.abs(out - ref))}"

    print("KERNEL_OK")
</pallas_src>

<mosaic_0001>
module attributes {stable_mosaic.version = 11 : i64} {
  func.func @_dense_layer_kernel(%arg0: i32, %arg1: memref<1x16x192xf32, #tpu.memory_space<vmem>>, %arg2: memref<1x192xf32, #tpu.memory_space<vmem>>, %arg3: memref<1x192xf32, #tpu.memory_space<vmem>>, %arg4: memref<192x512xbf16, #tpu.memory_space<vmem>>, %arg5: memref<1x512xf32, #tpu.memory_space<vmem>>, %arg6: memref<3x512x128xbf16, #tpu.memory_space<vmem>>, %arg7: memref<1x16x128xf32, #tpu.memory_space<vmem>>, %arg8: memref<18x512xf32, #tpu.memory_space<vmem>>) attributes {dimension_semantics = [#tpu.dimension_semantics<parallel>], iteration_bounds = array<i64: 2>, scalar_prefetch = 0 : i64, scratch_operands = 1 : i64, tpu.core_type = #tpu.core_type<tc>, window_params = [{transform_indices = @transform_0, window_bounds = array<i64: 1, 16, 192>}, {pipeline_mode = #tpu.pipeline_mode<synchronous>, transform_indices = @transform_1, window_bounds = array<i64: 1, 192>}, {pipeline_mode = #tpu.pipeline_mode<synchronous>, transform_indices = @transform_2, window_bounds = array<i64: 1, 192>}, {pipeline_mode = #tpu.pipeline_mode<synchronous>, transform_indices = @transform_3, window_bounds = array<i64: 192, 512>}, {pipeline_mode = #tpu.pipeline_mode<synchronous>, transform_indices = @transform_4, window_bounds = array<i64: 1, 512>}, {pipeline_mode = #tpu.pipeline_mode<synchronous>, transform_indices = @transform_5, window_bounds = array<i64: 3, 512, 128>}, {transform_indices = @transform_6, window_bounds = array<i64: 1, 16, 128>}]} {
    %c0 = arith.constant 0 : index
    %c0_0 = arith.constant 0 : index
    %c0_1 = arith.constant 0 : index
    %0 = vector.load %arg1[%c0, %c0_0, %c0_1] : memref<1x16x192xf32, #tpu.memory_space<vmem>>, vector<1x16x192xf32>
    %1 = vector.shape_cast %0 : vector<1x16x192xf32> to vector<16x192xf32>
    %c0_2 = arith.constant 0 : index
    %c0_3 = arith.constant 0 : index
    %2 = vector.load %arg2[%c0_2, %c0_3] : memref<1x192xf32, #tpu.memory_space<vmem>>, vector<1x192xf32>
    %3 = vector.shape_cast %2 : vector<1x192xf32> to vector<192xf32>
    %4 = vector.shape_cast %3 : vector<192xf32> to vector<1x192xf32>
    %5 = vector.broadcast %4 : vector<1x192xf32> to vector<16x192xf32>
    %6 = arith.mulf %1, %5 : vector<16x192xf32>
    %c0_4 = arith.constant 0 : index
    %c0_5 = arith.constant 0 : index
    %7 = vector.load %arg3[%c0_4, %c0_5] : memref<1x192xf32, #tpu.memory_space<vmem>>, vector<1x192xf32>
    %8 = vector.shape_cast %7 : vector<1x192xf32> to vector<192xf32>
    %9 = vector.shape_cast %8 : vector<192xf32> to vector<1x192xf32>
    %10 = vector.broadcast %9 : vector<1x192xf32> to vector<16x192xf32>
    %11 = arith.addf %6, %10 : vector<16x192xf32>
    %cst = arith.constant 0.000000e+00 : f32
    %12 = vector.broadcast %cst : f32 to vector<16x192xf32>
    %13 = arith.maximumf %11, %12 : vector<16x192xf32>
    %14 = arith.truncf %13 : vector<16x192xf32> to vector<16x192xbf16>
    %c0_6 = arith.constant 0 : index
    %c0_7 = arith.constant 0 : index
    %15 = vector.load %arg4[%c0_6, %c0_7] : memref<192x512xbf16, #tpu.memory_space<vmem>>, vector<192x512xbf16>
    %cst_8 = arith.constant dense<0.000000e+00> : vector<16x512xf32>
    %16 = tpu.matmul %14, %15, %cst_8 {dimension_numbers = #tpu.dot_dimension_numbers<[1], [0], [0], [1], [0, 0, 1, 1], [], []>} : vector<16x192xbf16>, vector<192x512xbf16>, vector<16x512xf32> -> vector<16x512xf32>
    %c0_9 = arith.constant 0 : index
    %c0_10 = arith.constant 0 : index
    %17 = vector.load %arg5[%c0_9, %c0_10] : memref<1x512xf32, #tpu.memory_space<vmem>>, vector<1x512xf32>
    %18 = vector.shape_cast %17 : vector<1x512xf32> to vector<512xf32>
    %19 = vector.shape_cast %18 : vector<512xf32> to vector<1x512xf32>
    %20 = vector.broadcast %19 : vector<1x512xf32> to vector<16x512xf32>
    %21 = arith.addf %16, %20 : vector<16x512xf32>
    %cst_11 = arith.constant 0.000000e+00 : f32
    %22 = vector.broadcast %cst_11 : f32 to vector<16x512xf32>
    %23 = arith.maximumf %21, %22 : vector<16x512xf32>
    %24 = arith.truncf %23 : vector<16x512xf32> to vector<16x512xbf16>
    %c1 = arith.constant 1 : index
    %c0_12 = arith.constant 0 : index
    %c0_13 = arith.constant 0 : index
    %25 = vector.load %arg6[%c1, %c0_12, %c0_13] : memref<3x512x128xbf16, #tpu.memory_space<vmem>>, vector<1x512x128xbf16>
    %26 = vector.shape_cast %25 : vector<1x512x128xbf16> to vector<512x128xbf16>
    %cst_14 = arith.constant dense<0.000000e+00> : vector<16x128xf32>
    %27 = tpu.matmul %24, %26, %cst_14 {dimension_numbers = #tpu.dot_dimension_numbers<[1], [0], [0], [1], [0, 0, 1, 1], [], []>} : vector<16x512xbf16>, vector<512x128xbf16>, vector<16x128xf32> -> vector<16x128xf32>
    %cst_15 = arith.constant 0.000000e+00 : f32
    %28 = vector.broadcast %cst_15 : f32 to vector<1x512xf32>
    %c0_16 = arith.constant 0 : index
    %c0_17 = arith.constant 0 : index
    %29 = vector.load %arg8[%c0_16, %c0_17] : memref<18x512xf32, #tpu.memory_space<vmem>>, vector<1x512xf32>
    tpu.vector_store %arg8[%c0_16, %c0_17], %28 {strides = array<i32>} : memref<18x512xf32, #tpu.memory_space<vmem>>, vector<1x512xf32>,
    %c17 = arith.constant 17 : index
    %c0_18 = arith.constant 0 : index
    %30 = vector.load %arg8[%c17, %c0_18] : memref<18x512xf32, #tpu.memory_space<vmem>>, vector<1x512xf32>
    tpu.vector_store %arg8[%c17, %c0_18], %28 {strides = array<i32>} : memref<18x512xf32, #tpu.memory_space<vmem>>, vector<1x512xf32>,
    %c1_19 = arith.constant 1 : index
    %c0_20 = arith.constant 0 : index
    %31 = vector.load %arg8[%c1_19, %c0_20] : memref<18x512xf32, #tpu.memory_space<vmem>>, vector<16x512xf32>
    tpu.vector_store %arg8[%c1_19, %c0_20], %23 {strides = array<i32>} : memref<18x512xf32, #tpu.memory_space<vmem>>, vector<16x512xf32>,
    %c0_21 = arith.constant 0 : index
    %c0_22 = arith.constant 0 : index
    %32 = vector.load %arg8[%c0_21, %c0_22] : memref<18x512xf32, #tpu.memory_space<vmem>>, vector<16x512xf32>
    %33 = arith.truncf %32 : vector<16x512xf32> to vector<16x512xbf16>
    %c0_23 = arith.constant 0 : index
    %c0_24 = arith.constant 0 : index
    %c0_25 = arith.constant 0 : index
    %34 = vector.load %arg6[%c0_23, %c0_24, %c0_25] : memref<3x512x128xbf16, #tpu.memory_space<vmem>>, vector<1x512x128xbf16>
    %35 = vector.shape_cast %34 : vector<1x512x128xbf16> to vector<512x128xbf16>
    %cst_26 = arith.constant dense<0.000000e+00> : vector<16x128xf32>
    %36 = tpu.matmul %33, %35, %cst_26 {dimension_numbers = #tpu.dot_dimension_numbers<[1], [0], [0], [1], [0, 0, 1, 1], [], []>} : vector<16x512xbf16>, vector<512x128xbf16>, vector<16x128xf32> -> vector<16x128xf32>
    %37 = arith.addf %27, %36 : vector<16x128xf32>
    %c2 = arith.constant 2 : index
    %c0_27 = arith.constant 0 : index
    %38 = vector.load %arg8[%c2, %c0_27] : memref<18x512xf32, #tpu.memory_space<vmem>>, vector<16x512xf32>
    %39 = arith.truncf %38 : vector<16x512xf32> to vector<16x512xbf16>
    %c2_28 = arith.constant 2 : index
    %c0_29 = arith.constant 0 : index
    %c0_30 = arith.constant 0 : index
    %40 = vector.load %arg6[%c2_28, %c0_29, %c0_30] : memref<3x512x128xbf16, #tpu.memory_space<vmem>>, vector<1x512x128xbf16>
    %41 = vector.shape_cast %40 : vector<1x512x128xbf16> to vector<512x128xbf16>
    %cst_31 = arith.constant dense<0.000000e+00> : vector<16x128xf32>
    %42 = tpu.matmul %39, %41, %cst_31 {dimension_numbers = #tpu.dot_dimension_numbers<[1], [0], [0], [1], [0, 0, 1, 1], [], []>} : vector<16x512xbf16>, vector<512x128xbf16>, vector<16x128xf32> -> vector<16x128xf32>
    %43 = arith.addf %37, %42 : vector<16x128xf32>
    %c0_32 = arith.constant 0 : index
    %c0_33 = arith.constant 0 : index
    %c0_34 = arith.constant 0 : index
    %44 = vector.load %arg7[%c0_32, %c0_33, %c0_34] : memref<1x16x128xf32, #tpu.memory_space<vmem>>, vector<1x16x128xf32>
    %45 = vector.shape_cast %44 : vector<1x16x128xf32> to vector<16x128xf32>
    %46 = vector.shape_cast %43 : vector<16x128xf32> to vector<1x16x128xf32>
    tpu.vector_store %arg7[%c0_32, %c0_33, %c0_34], %46 {strides = array<i32>} : memref<1x16x128xf32, #tpu.memory_space<vmem>>, vector<1x16x128xf32>,
    return
  }
  func.func @transform_0(%arg0: i32) -> (i32, i32, i32) {
    %c0_i32 = arith.constant 0 : i32
    %c0_i32_0 = arith.constant 0 : i32
    %c0_i32_1 = arith.constant 0 : i32
    return %arg0, %c0_i32, %c0_i32_0 : i32, i32, i32
  }
  func.func @transform_1(%arg0: i32) -> (i32, i32) {
    %c0_i32 = arith.constant 0 : i32
    %c0_i32_0 = arith.constant 0 : i32
    %c0_i32_1 = arith.constant 0 : i32
    return %c0_i32, %c0_i32_0 : i32, i32
  }
  func.func @transform_2(%arg0: i32) -> (i32, i32) {
    %c0_i32 = arith.constant 0 : i32
    %c0_i32_0 = arith.constant 0 : i32
    %c0_i32_1 = arith.constant 0 : i32
    return %c0_i32, %c0_i32_0 : i32, i32
  }
  func.func @transform_3(%arg0: i32) -> (i32, i32) {
    %c0_i32 = arith.constant 0 : i32
    %c0_i32_0 = arith.constant 0 : i32
    %c0_i32_1 = arith.constant 0 : i32
    return %c0_i32, %c0_i32_0 : i32, i32
  }
  func.func @transform_4(%arg0: i32) -> (i32, i32) {
    %c0_i32 = arith.constant 0 : i32
    %c0_i32_0 = arith.constant 0 : i32
    %c0_i32_1 = arith.constant 0 : i32
    return %c0_i32, %c0_i32_0 : i32, i32
  }
  func.func @transform_5(%arg0: i32) -> (i32, i32, i32) {
    %c0_i32 = arith.constant 0 : i32
    %c0_i32_0 = arith.constant 0 : i32
    %c0_i32_1 = arith.constant 0 : i32
    %c0_i32_2 = arith.constant 0 : i32
    return %c0_i32, %c0_i32_0, %c0_i32_1 : i32, i32, i32
  }
  func.func @transform_6(%arg0: i32) -> (i32, i32, i32) {
    %c0_i32 = arith.constant 0 : i32
    %c0_i32_0 = arith.constant 0 : i32
    %c0_i32_1 = arith.constant 0 : i32
    return %arg0, %c0_i32, %c0_i32_0 : i32, i32, i32
  }
}

</mosaic_0001>

<llo_original>
// kernel: dense_layer_forward.1
$region0: #{dense_layer_forward.1}
  #allocation0 [shape = 'u32[]', space=smem, size = 0x4, offset = 0x4, fixed_abs, tag = 'smem constant byte address 0x4 - core index']
  #allocation1 [shape = 'u32[144,128]{1,0:T(1,128)}', space=vmem, size = 0x12000, scoped, tag = 'internal scratch']
  #allocation2 [shape = 'f32[18,512]{1,0:T(8,128)}', space=vmem, size = 0xc000, scoped, tag = 'scratch operand']
  %s0 = inlined_call_operand.vmem [shape: f32[2,16,192], index: 0, kind: input, shape index: {}]
  %s1 = inlined_call_operand.vmem [shape: f32[1,192], index: 1, kind: input, shape index: {}]
  %s2 = inlined_call_operand.vmem [shape: f32[1,192], index: 2, kind: input, shape index: {}]
  %s3 = inlined_call_operand.vmem [shape: bf16[192,512], index: 3, kind: input, shape index: {}]
  %s4 = inlined_call_operand.vmem [shape: f32[1,512], index: 4, kind: input, shape index: {}]
  %s5 = inlined_call_operand.vmem [shape: bf16[3,512,128], index: 5, kind: input, shape index: {}]
  %s6 = inlined_call_operand.vmem [shape: f32[2,16,128], index: 6, kind: output, shape index: {}]
  %s7 = sld [smem:[#allocation0]]
  $region57: #{dense_layer_forward.1} parent=0
    _
  %s9 = ssub.s32 1, %s7
  %s10 = scalar_select 0, %s9, %s7
  loop: start=0, step=1, limit=4
  $region2: #{dense_layer_forward.1} parent=0 // loop_pre_header
    _
  $region3: #{dense_layer_forward.1} parent=0 // loop_header
    %s12 = sphi 0, %s16
    %p13 = scmp.ge.s32.totalorder %s12, 4
    %s22 = sphi 0, %s24
    %s25 = sphi 0, %s22
    %s26 = sphi 0, %s25
    %s42 = sphi 0, %s26
    %s46 = sphi 0, %s46
    %s48 = sphi 0, %s46
    %s49 = sphi 0, %s48
    %s63 = sphi 0, %s49
    %s67 = sphi 0, %s67
    %s69 = sphi 0, %s67
    %s70 = sphi 0, %s69
    %s84 = sphi 0, %s70
    %s88 = sphi 0, %s88
    %s90 = sphi 0, %s88
    %s91 = sphi 0, %s90
    %s105 = sphi 0, %s91
    %s109 = sphi 0, %s109
    %s111 = sphi 0, %s109
    %s112 = sphi 0, %s111
    %s126 = sphi 0, %s112
    %s130 = sphi 0, %s130
    %s132 = sphi 0, %s130
    %s133 = sphi 0, %s132
    %s147 = sphi 0, %s133
    %s153 = sphi 0, %s155
    %s156 = sphi 0, %s153
    %s157 = sphi 0, %s156
    %s173 = sphi 0, %s157
  $region4: #{dense_layer_forward.1} parent=0 // loop_header_branch
    %15 = sbr.rel (%p13) target = $region8
  $region5: #{dense_layer_forward.1} parent=0 // loop_body
    %s17 = ssub.s32 %s12, 1
    %s18 = ssub.s32 %s12, 2
    %s19 = sadd.s32 %s12, 1
    %s20 = ssub.s32 %s12, %s19
    %p21 = scmp.eq.s32.totalorder %s20, 0
    %s23 = sadd.s32 %s22, 1
    %s24 = scalar_select %p21, %s22, %s23
    %p27 = pneg %p21
    %p28 = scmp.eq.s32.totalorder %s12, 1
    %p29 = por %p27, %p28
    %p30 = scmp.ne.s32.totalorder %s22, %s25
    %p31 = scmp.eq.s32.totalorder %s12, 0
    %p32 = por %p30, %p31
    %p33 = scmp.ne.s32.totalorder %s22, %s25
    %p34 = scmp.eq.s32.totalorder %s17, 1
    %p35 = por %p33, %p34
    %p36 = scmp.ne.s32.totalorder %s25, %s26
    %p37 = scmp.eq.s32.totalorder %s17, 0
    %p38 = por %p36, %p37
    %p39 = scmp.ne.s32.totalorder %s25, %s26
    %p40 = scmp.eq.s32.totalorder %s18, 1
    %p41 = por %p39, %p40
    %p43 = scmp.ne.s32.totalorder %s26, %s42
    %p44 = scmp.eq.s32.totalorder %s18, 0
    %p45 = por %p43, %p44
    %s47 = sadd.s32 %s46, 1
    %p50 = scmp.eq.s32.totalorder %s12, 1
    %p51 = scmp.ne.s32.totalorder %s46, %s48
    %p52 = scmp.eq.s32.totalorder %s12, 0
    %p53 = por %p51, %p52
    %p54 = scmp.ne.s32.totalorder %s46, %s48
    %p55 = scmp.eq.s32.totalorder %s17, 1
    %p56 = por %p54, %p55
    %p57 = scmp.ne.s32.totalorder %s48, %s49
    %p58 = scmp.eq.s32.totalorder %s17, 0
    %p59 = por %p57, %p58
    %p60 = scmp.ne.s32.totalorder %s48, %s49
    %p61 = scmp.eq.s32.totalorder %s18, 1
    %p62 = por %p60, %p61
    %p64 = scmp.ne.s32.totalorder %s49, %s63
    %p65 = scmp.eq.s32.totalorder %s18, 0
    %p66 = por %p64, %p65
    %s68 = sadd.s32 %s67, 1
    %p71 = scmp.eq.s32.totalorder %s12, 1
    %p72 = scmp.ne.s32.totalorder %s67, %s69
    %p73 = scmp.eq.s32.totalorder %s12, 0
    %p74 = por %p72, %p73
    %p75 = scmp.ne.s32.totalorder %s67, %s69
    %p76 = scmp.eq.s32.totalorder %s17, 1
    %p77 = por %p75, %p76
    %p78 = scmp.ne.s32.totalorder %s69, %s70
    %p79 = scmp.eq.s32.totalorder %s17, 0
    %p80 = por %p78, %p79
    %p81 = scmp.ne.s32.totalorder %s69, %s70
    %p82 = scmp.eq.s32.totalorder %s18, 1
    %p83 = por %p81, %p82
    %p85 = scmp.ne.s32.totalorder %s70, %s84
    %p86 = scmp.eq.s32.totalorder %s18, 0
    %p87 = por %p85, %p86
    %s89 = sadd.s32 %s88, 1
    %p92 = scmp.eq.s32.totalorder %s12, 1
    %p93 = scmp.ne.s32.totalorder %s88, %s90
    %p94 = scmp.eq.s32.totalorder %s12, 0
    %p95 = por %p93, %p94
    %p96 = scmp.ne.s32.totalorder %s88, %s90
    %p97 = scmp.eq.s32.totalorder %s17, 1
    %p98 = por %p96, %p97
    %p99 = scmp.ne.s32.totalorder %s90, %s91
    %p100 = scmp.eq.s32.totalorder %s17, 0
    %p101 = por %p99, %p100
    %p102 = scmp.ne.s32.totalorder %s90, %s91
    %p103 = scmp.eq.s32.totalorder %s18, 1
    %p104 = por %p102, %p103
    %p106 = scmp.ne.s32.totalorder %s91, %s105
    %p107 = scmp.eq.s32.totalorder %s18, 0
    %p108 = por %p106, %p107
    %s110 = sadd.s32 %s109, 1
    %p113 = scmp.eq.s32.totalorder %s12, 1
    %p114 = scmp.ne.s32.totalorder %s109, %s111
    %p115 = scmp.eq.s32.totalorder %s12, 0
    %p116 = por %p114, %p115
    %p117 = scmp.ne.s32.totalorder %s109, %s111
    %p118 = scmp.eq.s32.totalorder %s17, 1
    %p119 = por %p117, %p118
    %p120 = scmp.ne.s32.totalorder %s111, %s112
    %p121 = scmp.eq.s32.totalorder %s17, 0
    %p122 = por %p120, %p121
    %p123 = scmp.ne.s32.totalorder %s111, %s112
    %p124 = scmp.eq.s32.totalorder %s18, 1
    %p125 = por %p123, %p124
    %p127 = scmp.ne.s32.totalorder %s112, %s126
    %p128 = scmp.eq.s32.totalorder %s18, 0
    %p129 = por %p127, %p128
    %s131 = sadd.s32 %s130, 1
    %p134 = scmp.eq.s32.totalorder %s12, 1
    %p135 = scmp.ne.s32.totalorder %s130, %s132
    %p136 = scmp.eq.s32.totalorder %s12, 0
    %p137 = por %p135, %p136
    %p138 = scmp.ne.s32.totalorder %s130, %s132
    %p139 = scmp.eq.s32.totalorder %s17, 1
    %p140 = por %p138, %p139
    %p141 = scmp.ne.s32.totalorder %s132, %s133
    %p142 = scmp.eq.s32.totalorder %s17, 0
    %p143 = por %p141, %p142
    %p144 = scmp.ne.s32.totalorder %s132, %s133
    %p145 = scmp.eq.s32.totalorder %s18, 1
    %p146 = por %p144, %p145
    %p148 = scmp.ne.s32.totalorder %s133, %s147
    %p149 = scmp.eq.s32.totalorder %s18, 0
    %p150 = por %p148, %p149
    %s151 = ssub.s32 %s12, %s19
    %p152 = scmp.eq.s32.totalorder %s151, 0
    %s154 = sadd.s32 %s153, 1
    %s155 = scalar_select %p152, %s153, %s154
    %p158 = pneg %p152
    %p159 = scmp.eq.s32.totalorder %s12, 1
    %p160 = por %p158, %p159
    %p161 = scmp.ne.s32.totalorder %s153, %s156
    %p162 = scmp.eq.s32.totalorder %s12, 0
    %p163 = por %p161, %p162
    %p164 = scmp.ne.s32.totalorder %s153, %s156
    %p165 = scmp.eq.s32.totalorder %s17, 1
    %p166 = por %p164, %p165
    %p167 = scmp.ne.s32.totalorder %s156, %s157
    %p168 = scmp.eq.s32.totalorder %s17, 0
    %p169 = por %p167, %p168
    %p170 = scmp.ne.s32.totalorder %s156, %s157
    %p171 = scmp.eq.s32.totalorder %s18, 1
    %p172 = por %p170, %p171
    %p174 = scmp.ne.s32.totalorder %s157, %s173
    %p175 = scmp.eq.s32.totalorder %s18, 0
    %p176 = por %p174, %p175
    %p177 = scmp.le.s32.totalorder 1, %s12
    %p178 = scmp.lt.s32.totalorder %s12, 3
    %p179 = pnand %p177, %p178
    %p180 = pneg %p179
    // Predicated region
    $region9: #{dense_layer_forward.1} parent=5 // pred_check
      _
    $region10: #{dense_layer_forward.1} parent=5 // pred_check_branch
      %182 = sbr.rel (%p179) target = $region12
    $region11: #{dense_layer_forward.1} parent=5 // pred_region
      %s183 = ssub.s32 %s12, 1
      // Predicated region
      $region13: #{dense_layer_forward.1} parent=11 // pred_check
        %p184 = pneg %p59
      $region14: #{dense_layer_forward.1} parent=11 // pred_check_branch
        %186 = sbr.rel (%p184) target = $region16
      $region15: #{dense_layer_forward.1} parent=11 // pred_region
        _
      $region16: #{dense_layer_forward.1} parent=11 // pred_fallthru
        _
      // Predicated region
      $region17: #{dense_layer_forward.1} parent=11 // pred_check
        %p187 = pneg %p80
      $region18: #{dense_layer_forward.1} parent=11 // pred_check_branch
        %189 = sbr.rel (%p187) target = $region20
      $region19: #{dense_layer_forward.1} parent=11 // pred_region
        _
      $region20: #{dense_layer_forward.1} parent=11 // pred_fallthru
        _
      // Predicated region
      $region21: #{dense_layer_forward.1} parent=11 // pred_check
        %p190 = pneg %p101
      $region22: #{dense_layer_forward.1} parent=11 // pred_check_branch
        %192 = sbr.rel (%p190) target = $region24
      $region23: #{dense_layer_forward.1} parent=11 // pred_region
        _
      $region24: #{dense_layer_forward.1} parent=11 // pred_fallthru
        _
      // Predicated region
      $region25: #{dense_layer_forward.1} parent=11 // pred_check
        %p193 = pneg %p122
      $region26: #{dense_layer_forward.1} parent=11 // pred_check_branch
        %195 = sbr.rel (%p193) target = $region28
      $region27: #{dense_layer_forward.1} parent=11 // pred_region
        _
      $region28: #{dense_layer_forward.1} parent=11 // pred_fallthru
        _
      // Predicated region
      $region29: #{dense_layer_forward.1} parent=11 // pred_check
        %p196 = pneg %p143
      $region30: #{dense_layer_forward.1} parent=11 // pred_check_branch
        %198 = sbr.rel (%p196) target = $region32
      $region31: #{dense_layer_forward.1} parent=11 // pred_region
        _
      $region32: #{dense_layer_forward.1} parent=11 // pred_fallthru
        _
    $region12: #{dense_layer_forward.1} parent=5 // pred_fallthru
      _
    %p199 = scmp.lt.s32.totalorder %s12, 2
    // Predicated region
    $region33: #{dense_layer_forward.1} parent=5 // pred_check
      %p200 = pneg %p199
    $region34: #{dense_layer_forward.1} parent=5 // pred_check_branch
      %202 = sbr.rel (%p200) target = $region36
    $region35: #{dense_layer_forward.1} parent=5 // pred_region
      // Predicated region
      $region37: #{dense_layer_forward.1} parent=35 // pred_check
        %p203 = pneg %p32
      $region38: #{dense_layer_forward.1} parent=35 // pred_check_branch
        %205 = sbr.rel (%p203) target = $region40
      $region39: #{dense_layer_forward.1} parent=35 // pred_region
        %p206 = scmp.lt.s32.totalorder %s12, 1
        %s207 = scalar_select %p206, %s12, 1
        %s208 = smul.addr %s207, 4
        %s209 = smul.addr %s208, 8
        %s210 = scalar_lea.vmem %s0, %s209
      $region40: #{dense_layer_forward.1} parent=35 // pred_fallthru
        _
    $region36: #{dense_layer_forward.1} parent=5 // pred_fallthru
      _
    %p211 = scmp.le.s32.totalorder 1, %s12
    %p212 = scmp.lt.s32.totalorder %s12, 3
    %p213 = pnand %p211, %p212
    %p214 = pneg %p213
    // Predicated region
    $region41: #{dense_layer_forward.1} parent=5 // pred_check
      _
    $region42: #{dense_layer_forward.1} parent=5 // pred_check_branch
      %216 = sbr.rel (%p213) target = $region44
    $region43: #{dense_layer_forward.1} parent=5 // pred_region
      %s217 = ssub.s32 %s12, 1
      %p218 = scmp.lt.s32.totalorder %s17, 1
      %s219 = scalar_select %p218, %s17, 1
      %s220 = smul.addr %s219, 4
      %s221 = smul.addr %s220, 8
      %s222 = scalar_lea.vmem %s0, %s221
      %p223 = pneg %p38
      %p224 = pneg %p35
      %p225 = pneg %p59
      %p226 = pneg %p56
      %p227 = pneg %p80
      %p228 = pneg %p77
      %p229 = pneg %p101
      %p230 = pneg %p98
      %p231 = pneg %p122
      %p232 = pneg %p119
      %p233 = pneg %p143
      %p234 = pneg %p140
      %p235 = pneg %p169
      %p236 = pneg %p166
      %p237 = scmp.lt.s32.totalorder %s17, 1
      %s238 = scalar_select %p237, %s17, 1
      %s239 = smul.addr %s238, 2
      %s240 = smul.addr %s239, 8
      %s241 = scalar_lea.vmem %s6, %s240
      %p242 = scmp.lt.s32.totalorder %s17, 1
      %s243 = scalar_select %p242, %s17, 1
      %s244 = smul.addr %s243, 4
      %s245 = smul.addr %s244, 8
      %s246 = scalar_lea.vmem %s0, %s245
      %p247 = scmp.lt.s32.totalorder %s17, 1
      %s248 = scalar_select %p247, %s17, 1
      %s249 = smul.addr %s248, 2
      %s250 = smul.addr %s249, 8
      %s251 = scalar_lea.vmem %s6, %s250
      %v253 = vld [vmem:[%s246] sm:$0xff]
      %v254 = vld [vmem:[%s246 + $0x8] sm:$0xff]
      %v255 = vld [vmem:[%s246 + $0x10] sm:$0xff]
      %v256 = vld [vmem:[%s246 + $0x18] sm:$0xff]
      %v257 = vld [vmem:[%s1] sm:$0x3]
      %v259 = vlaneseq
      %v260 = vshrl.u32 %v259, 7
      %v261 = vsub.s32 0, %v260
      %v262 = vrot.slane %v257, %v261
      %v263 = vlaneseq
      %v264 = vshrl.u32 %v263, 7
      %v265 = vsub.s32 1, %v264
      %v266 = vrot.slane %v257, %v265
      %v269 = vmul.f32 %v253, %v262
      %v270 = vmul.f32 %v254, %v266
      %v271 = vmul.f32 %v255, %v262
      %v272 = vmul.f32 %v256, %v266
      %v273 = vld [vmem:[%s2] sm:$0x3]
      %v275 = vlaneseq
      %v276 = vshrl.u32 %v275, 7
      %v277 = vsub.s32 0, %v276
      %v278 = vrot.slane %v273, %v277
      %v279 = vlaneseq
      %v280 = vshrl.u32 %v279, 7
      %v281 = vsub.s32 1, %v280
      %v282 = vrot.slane %v273, %v281
      %v285 = vadd.f32 %v269, %v278
      %v286 = vadd.f32 %v270, %v282
      %v287 = vadd.f32 %v271, %v278
      %v288 = vadd.f32 %v272, %v282
      %v289 = vmax.f32 %v285, 0.0
      %v290 = vmax.f32 %v286, 0.0
      %v291 = vmax.f32 %v287, 0.0
      %v292 = vmax.f32 %v288, 0.0
      %v293 = vpack.c.bf16 %v291, %v289
      %v294 = vpack.c.bf16 %v292, %v290
      %v295 = vld [vmem:[%s3] sm:$0xff]
      %v296 = vld [vmem:[%s3 + $0x8] sm:$0xff]
      %v297 = vld [vmem:[%s3 + $0x10] sm:$0xff]
      %v298 = vld [vmem:[%s3 + $0x18] sm:$0xff]
      %v299 = vld [vmem:[%s3 + $0x20] sm:$0xff]
      %v300 = vld [vmem:[%s3 + $0x28] sm:$0xff]
      %v301 = vld [vmem:[%s3 + $0x30] sm:$0xff]
      %v302 = vld [vmem:[%s3 + $0x38] sm:$0xff]
      %v303 = vld [vmem:[%s3 + $0x40] sm:$0xff]
      %v304 = vld [vmem:[%s3 + $0x48] sm:$0xff]
      %v305 = vld [vmem:[%s3 + $0x50] sm:$0xff]
      %v306 = vld [vmem:[%s3 + $0x58] sm:$0xff]
      %v307 = vld [vmem:[%s3 + $0x60] sm:$0xff]
      %v308 = vld [vmem:[%s3 + $0x68] sm:$0xff]
      %v309 = vld [vmem:[%s3 + $0x70] sm:$0xff]
      %v310 = vld [vmem:[%s3 + $0x78] sm:$0xff]
      %v311 = vld [vmem:[%s3 + $0x80] sm:$0xff]
      %v312 = vld [vmem:[%s3 + $0x88] sm:$0xff]
      %v313 = vld [vmem:[%s3 + $0x90] sm:$0xff]
      %v314 = vld [vmem:[%s3 + $0x98] sm:$0xff]
      %v315 = vld [vmem:[%s3 + $0xa0] sm:$0xff]
      %v316 = vld [vmem:[%s3 + $0xa8] sm:$0xff]
      %v317 = vld [vmem:[%s3 + $0xb0] sm:$0xff]
      %v318 = vld [vmem:[%s3 + $0xb8] sm:$0xff]
      %v319 = vld [vmem:[%s3 + $0xc0] sm:$0xff]
      %v320 = vld [vmem:[%s3 + $0xc8] sm:$0xff]
      %v321 = vld [vmem:[%s3 + $0xd0] sm:$0xff]
      %v322 = vld [vmem:[%s3 + $0xd8] sm:$0xff]
      %v323 = vld [vmem:[%s3 + $0xe0] sm:$0xff]
      %v324 = vld [vmem:[%s3 + $0xe8] sm:$0xff]
      %v325 = vld [vmem:[%s3 + $0xf0] sm:$0xff]
      %v326 = vld [vmem:[%s3 + $0xf8] sm:$0xff]
      %v327 = vld [vmem:[%s3 + $0x100] sm:$0xff]
      %v328 = vld [vmem:[%s3 + $0x108] sm:$0xff]
      %v329 = vld [vmem:[%s3 + $0x110] sm:$0xff]
      %v330 = vld [vmem:[%s3 + $0x118] sm:$0xff]
      %v331 = vld [vmem:[%s3 + $0x120] sm:$0xff]
      %v332 = vld [vmem:[%s3 + $0x128] sm:$0xff]
      %v333 = vld [vmem:[%s3 + $0x130] sm:$0xff]
      %v334 = vld [vmem:[%s3 + $0x138] sm:$0xff]
      %v335 = vld [vmem:[%s3 + $0x140] sm:$0xff]
      %v336 = vld [vmem:[%s3 + $0x148] sm:$0xff]
      %v337 = vld [vmem:[%s3 + $0x150] sm:$0xff]
      %v338 = vld [vmem:[%s3 + $0x158] sm:$0xff]
      %v339 = vld [vmem:[%s3 + $0x160] sm:$0xff]
      %v340 = vld [vmem:[%s3 + $0x168] sm:$0xff]
      %v341 = vld [vmem:[%s3 + $0x170] sm:$0xff]
      %v342 = vld [vmem:[%s3 + $0x178] sm:$0xff]
      %v343 = vld [vmem:[%s4] sm:$0xf]
      %v345 = vlaneseq
      %v346 = vshrl.u32 %v345, 7
      %v347 = vsub.s32 0, %v346
      %v348 = vrot.slane %v343, %v347
      %v349 = vlaneseq
      %v350 = vshrl.u32 %v349, 7
      %v351 = vsub.s32 1, %v350
      %v352 = vrot.slane %v343, %v351
      %v353 = vlaneseq
      %v354 = vshrl.u32 %v353, 7
      %v355 = vsub.s32 2, %v354
      %v356 = vrot.slane %v343, %v355
      %v357 = vlaneseq
      %v358 = vshrl.u32 %v357, 7
      %v359 = vsub.s32 3, %v358
      %v360 = vrot.slane %v343, %v359
      %v413 = vunpack.c.l.b16 %v295
      %v414 = vunpack.c.h.b16 %v295
      %v415 = vunpack.c.l.b16 %v296
      %v416 = vunpack.c.h.b16 %v296
      %v417 = vunpack.c.l.b16 %v297
      %v418 = vunpack.c.h.b16 %v297
      %v419 = vunpack.c.l.b16 %v298
      %v420 = vunpack.c.h.b16 %v298
      %v421 = vunpack.c.l.b16 %v299
      %v422 = vunpack.c.h.b16 %v299
      %v423 = vunpack.c.l.b16 %v300
      %v424 = vunpack.c.h.b16 %v300
      %v425 = vunpack.c.l.b16 %v301
      %v426 = vunpack.c.h.b16 %v301
      %v427 = vunpack.c.l.b16 %v302
      %v428 = vunpack.c.h.b16 %v302
      %v429 = vunpack.c.l.b16 %v303
      %v430 = vunpack.c.h.b16 %v303
      %v431 = vunpack.c.l.b16 %v304
      %v432 = vunpack.c.h.b16 %v304
      %v433 = vunpack.c.l.b16 %v305
      %v434 = vunpack.c.h.b16 %v305
      %v435 = vunpack.c.l.b16 %v306
      %v436 = vunpack.c.h.b16 %v306
      %v437 = vunpack.c.l.b16 %v307
      %v438 = vunpack.c.h.b16 %v307
      %v439 = vunpack.c.l.b16 %v308
      %v440 = vunpack.c.h.b16 %v308
      %v441 = vunpack.c.l.b16 %v309
      %v442 = vunpack.c.h.b16 %v309
      %v443 = vunpack.c.l.b16 %v310
      %v444 = vunpack.c.h.b16 %v310
      %v445 = vunpack.c.l.b16 %v311
      %v446 = vunpack.c.h.b16 %v311
      %v447 = vunpack.c.l.b16 %v312
      %v448 = vunpack.c.h.b16 %v312
      %v449 = vunpack.c.l.b16 %v313
      %v450 = vunpack.c.h.b16 %v313
      %v451 = vunpack.c.l.b16 %v314
      %v452 = vunpack.c.h.b16 %v314
      %v453 = vunpack.c.l.b16 %v315
      %v454 = vunpack.c.h.b16 %v315
      %v455 = vunpack.c.l.b16 %v316
      %v456 = vunpack.c.h.b16 %v316
      %v457 = vunpack.c.l.b16 %v317
      %v458 = vunpack.c.h.b16 %v317
      %v459 = vunpack.c.l.b16 %v318
      %v460 = vunpack.c.h.b16 %v318
      %v461 = vunpack.c.l.b16 %v319
      %v462 = vunpack.c.h.b16 %v319
      %v463 = vunpack.c.l.b16 %v320
      %v464 = vunpack.c.h.b16 %v320
      %v465 = vunpack.c.l.b16 %v321
      %v466 = vunpack.c.h.b16 %v321
      %v467 = vunpack.c.l.b16 %v322
      %v468 = vunpack.c.h.b16 %v322
      %v469 = vunpack.c.l.b16 %v323
      %v470 = vunpack.c.h.b16 %v323
      %v471 = vunpack.c.l.b16 %v324
      %v472 = vunpack.c.h.b16 %v324
      %v473 = vunpack.c.l.b16 %v325
      %v474 = vunpack.c.h.b16 %v325
      %v475 = vunpack.c.l.b16 %v326
      %v476 = vunpack.c.h.b16 %v326
      %v477 = vunpack.c.l.b16 %v327
      %v478 = vunpack.c.h.b16 %v327
      %v479 = vunpack.c.l.b16 %v328
      %v480 = vunpack.c.h.b16 %v328
      %v481 = vunpack.c.l.b16 %v329
      %v482 = vunpack.c.h.b16 %v329
      %v483 = vunpack.c.l.b16 %v330
      %v484 = vunpack.c.h.b16 %v330
      %v485 = vunpack.c.l.b16 %v331
      %v486 = vunpack.c.h.b16 %v331
      %v487 = vunpack.c.l.b16 %v332
      %v488 = vunpack.c.h.b16 %v332
      %v489 = vunpack.c.l.b16 %v333
      %v490 = vunpack.c.h.b16 %v333
      %v491 = vunpack.c.l.b16 %v334
      %v492 = vunpack.c.h.b16 %v334
      %v493 = vunpack.c.l.b16 %v335
      %v494 = vunpack.c.h.b16 %v335
      %v495 = vunpack.c.l.b16 %v336
      %v496 = vunpack.c.h.b16 %v336
      %v497 = vunpack.c.l.b16 %v337
      %v498 = vunpack.c.h.b16 %v337
      %v499 = vunpack.c.l.b16 %v338
      %v500 = vunpack.c.h.b16 %v338
      %v501 = vunpack.c.l.b16 %v339
      %v502 = vunpack.c.h.b16 %v339
      %v503 = vunpack.c.l.b16 %v340
      %v504 = vunpack.c.h.b16 %v340
      %v505 = vunpack.c.l.b16 %v341
      %v506 = vunpack.c.h.b16 %v341
      %v507 = vunpack.c.l.b16 %v342
      %v508 = vunpack.c.h.b16 %v342
      %v509 = vpack.c.b16 %v417, %v413
      %v510 = vpack.c.b16 %v418, %v414
      %v511 = vpack.c.b16 %v419, %v415
      %v512 = vpack.c.b16 %v420, %v416
      %v513 = vpack.c.b16 %v425, %v421
      %v514 = vpack.c.b16 %v426, %v422
      %v515 = vpack.c.b16 %v427, %v423
      %v516 = vpack.c.b16 %v428, %v424
      %v517 = vpack.c.b16 %v433, %v429
      %v518 = vpack.c.b16 %v434, %v430
      %v519 = vpack.c.b16 %v435, %v431
      %v520 = vpack.c.b16 %v436, %v432
      %v521 = vpack.c.b16 %v441, %v437
      %v522 = vpack.c.b16 %v442, %v438
      %v523 = vpack.c.b16 %v443, %v439
      %v524 = vpack.c.b16 %v444, %v440
      %v525 = vpack.c.b16 %v449, %v445
      %v526 = vpack.c.b16 %v450, %v446
      %v527 = vpack.c.b16 %v451, %v447
      %v528 = vpack.c.b16 %v452, %v448
      %v529 = vpack.c.b16 %v457, %v453
      %v530 = vpack.c.b16 %v458, %v454
      %v531 = vpack.c.b16 %v459, %v455
      %v532 = vpack.c.b16 %v460, %v456
      %v533 = vpack.c.b16 %v465, %v461
      %v534 = vpack.c.b16 %v466, %v462
      %v535 = vpack.c.b16 %v467, %v463
      %v536 = vpack.c.b16 %v468, %v464
      %v537 = vpack.c.b16 %v473, %v469
      %v538 = vpack.c.b16 %v474, %v470
      %v539 = vpack.c.b16 %v475, %v471
      %v540 = vpack.c.b16 %v476, %v472
      %v541 = vpack.c.b16 %v481, %v477
      %v542 = vpack.c.b16 %v482, %v478
      %v543 = vpack.c.b16 %v483, %v479
      %v544 = vpack.c.b16 %v484, %v480
      %v545 = vpack.c.b16 %v489, %v485
      %v546 = vpack.c.b16 %v490, %v486
      %v547 = vpack.c.b16 %v491, %v487
      %v548 = vpack.c.b16 %v492, %v488
      %v549 = vpack.c.b16 %v497, %v493
      %v550 = vpack.c.b16 %v498, %v494
      %v551 = vpack.c.b16 %v499, %v495
      %v552 = vpack.c.b16 %v500, %v496
      %v553 = vpack.c.b16 %v505, %v501
      %v554 = vpack.c.b16 %v506, %v502
      %v555 = vpack.c.b16 %v507, %v503
      %v556 = vpack.c.b16 %v508, %v504
      %vm605 = vcmask 523264
      %v607 = vsel %vm605, %v294, 0
      %609 = vmatprep.subr.bf16.mxu0 %v510
      %610 = vmatpush1.bf16.msra.mxu0 %v509
      %611 = vmatprep.subr.bf16.mxu0 %v514
      %612 = vmatpush1.bf16.msra.mxu0 %v513
      %613 = vmatprep.subr.bf16.mxu0 %v518
      %614 = vmatpush1.bf16.msra.mxu0 %v517
      %615 = vmatprep.subr.bf16.mxu0 %v522
      %616 = vmatpush1.bf16.msra.mxu0 %v521
      %617 = vmatprep.subr.bf16.mxu0 %v526
      %618 = vmatpush1.bf16.msra.mxu0 %v525
      %619 = vmatprep.subr.bf16.mxu0 %v530
      %620 = vmatpush1.bf16.msra.mxu0 %v529
      %621 = vmatprep.subr.bf16.mxu0 %v534
      %622 = vmatpush1.bf16.msra.mxu0 %v533
      %623 = vmatprep.subr.bf16.mxu0 %v538
      %624 = vmatpush1.bf16.msra.mxu0 %v537
      %625 = vmatprep.subr.bf16.mxu0 %v542
      %626 = vmatpush1.bf16.msra.mxu0 %v541
      %627 = vmatprep.subr.bf16.mxu0 %v546
      %628 = vmatpush1.bf16.msra.mxu0 %v545
      %629 = vmatprep.subr.bf16.mxu0 %v550
      %630 = vmatpush1.bf16.msra.mxu0 %v549
      %631 = vmatprep.subr.bf16.mxu0 %v554
      %632 = vmatpush1.bf16.msra.mxu0 %v553
      %633 = vmatprep.subr.bf16.mxu0 0
      %634 = vmatpush1.bf16.msra.mxu0 0
      %635 = vmatprep.subr.bf16.mxu0 0
      %636 = vmatpush1.bf16.msra.mxu0 0
      %637 = vmatprep.subr.bf16.mxu0 0
      %638 = vmatpush1.bf16.msra.mxu0 0
      %639 = vmatprep.subr.bf16.mxu0 0
      %640 = vmatpush1.bf16.msra.mxu0 0
      %641 = vmatprep.mubr.bf16.mxu0 %v607
      %642 = vmatmul.mubr.bf16.gmra.mrb[0].mxu0 %v293
      %v643 = vpop.f32.mrb[0].mxu0
      %v644 = vadd.f32 %v348, %v643
      %v645 = vpop.f32.mrb[0].mxu0
      %v646 = vadd.f32 %v352, %v645
      %v647 = vpop.f32.mrb[0].mxu0
      %v648 = vadd.f32 %v348, %v647
      %v649 = vpop.f32.mrb[0].mxu0
      %v650 = vadd.f32 %v352, %v649
      %651 = vdwg.mxu0
      %652 = vmatprep.subr.bf16.mxu0 %v512
      %653 = vmatpush1.bf16.msra.mxu0 %v511
      %654 = vmatprep.subr.bf16.mxu0 %v516
      %655 = vmatpush1.bf16.msra.mxu0 %v515
      %656 = vmatprep.subr.bf16.mxu0 %v520
      %657 = vmatpush1.bf16.msra.mxu0 %v519
      %658 = vmatprep.subr.bf16.mxu0 %v524
      %659 = vmatpush1.bf16.msra.mxu0 %v523
      %660 = vmatprep.subr.bf16.mxu0 %v528
      %661 = vmatpush1.bf16.msra.mxu0 %v527
      %662 = vmatprep.subr.bf16.mxu0 %v532
      %663 = vmatpush1.bf16.msra.mxu0 %v531
      %664 = vmatprep.subr.bf16.mxu0 %v536
      %665 = vmatpush1.bf16.msra.mxu0 %v535
      %666 = vmatprep.subr.bf16.mxu0 %v540
      %667 = vmatpush1.bf16.msra.mxu0 %v539
      %668 = vmatprep.subr.bf16.mxu0 %v544
      %669 = vmatpush1.bf16.msra.mxu0 %v543
      %670 = vmatprep.subr.bf16.mxu0 %v548
      %671 = vmatpush1.bf16.msra.mxu0 %v547
      %672 = vmatprep.subr.bf16.mxu0 %v552
      %673 = vmatpush1.bf16.msra.mxu0 %v551
      %674 = vmatprep.subr.bf16.mxu0 %v556
      %675 = vmatpush1.bf16.msra.mxu0 %v555
      %676 = vmatprep.subr.bf16.mxu0 0
      %677 = vmatpush1.bf16.msra.mxu0 0
      %678 = vmatprep.subr.bf16.mxu0 0
      %679 = vmatpush1.bf16.msra.mxu0 0
      %680 = vmatprep.subr.bf16.mxu0 0
      %681 = vmatpush1.bf16.msra.mxu0 0
      %682 = vmatprep.subr.bf16.mxu0 0
      %683 = vmatpush1.bf16.msra.mxu0 0
      %684 = vmatprep.mubr.bf16.mxu0 %v607
      %685 = vmatmul.mubr.bf16.gmra.mrb[0].mxu0 %v293
      %v686 = vpop.f32.mrb[0].mxu0
      %v687 = vadd.f32 %v356, %v686
      %v688 = vpop.f32.mrb[0].mxu0
      %v689 = vadd.f32 %v360, %v688
      %v690 = vpop.f32.mrb[0].mxu0
      %v691 = vadd.f32 %v356, %v690
      %v692 = vpop.f32.mrb[0].mxu0
      %v693 = vadd.f32 %v360, %v692
      %694 = vdwg.mxu0
      %v695 = vmax.f32 %v644, 0.0
      %v696 = vmax.f32 %v646, 0.0
      %v697 = vmax.f32 %v687, 0.0
      %v698 = vmax.f32 %v689, 0.0
      %v699 = vmax.f32 %v648, 0.0
      %v700 = vmax.f32 %v650, 0.0
      %v701 = vmax.f32 %v691, 0.0
      %v702 = vmax.f32 %v693, 0.0
      %v703 = vpack.c.bf16 %v699, %v695
      %v704 = vpack.c.bf16 %v700, %v696
      %v705 = vpack.c.bf16 %v701, %v697
      %v706 = vpack.c.bf16 %v702, %v698
      %s707 = scalar_lea.vmem %s5, 256
      %v708 = vld [vmem:[%s707] sm:$0xf]
      %v709 = vld [vmem:[%s707 + $0x4] sm:$0xf]
      %v710 = vld [vmem:[%s707 + $0x8] sm:$0xf]
      %v711 = vld [vmem:[%s707 + $0xc] sm:$0xf]
      %v712 = vld [vmem:[%s707 + $0x10] sm:$0xf]
      %v713 = vld [vmem:[%s707 + $0x14] sm:$0xf]
      %v714 = vld [vmem:[%s707 + $0x18] sm:$0xf]
      %v715 = vld [vmem:[%s707 + $0x1c] sm:$0xf]
      %v716 = vld [vmem:[%s707 + $0x20] sm:$0xf]
      %v717 = vld [vmem:[%s707 + $0x24] sm:$0xf]
      %v718 = vld [vmem:[%s707 + $0x28] sm:$0xf]
      %v719 = vld [vmem:[%s707 + $0x2c] sm:$0xf]
      %v720 = vld [vmem:[%s707 + $0x30] sm:$0xf]
      %v721 = vld [vmem:[%s707 + $0x34] sm:$0xf]
      %v722 = vld [vmem:[%s707 + $0x38] sm:$0xf]
      %v723 = vld [vmem:[%s707 + $0x3c] sm:$0xf]
      %v724 = vld [vmem:[%s707 + $0x40] sm:$0xf]
      %v725 = vld [vmem:[%s707 + $0x44] sm:$0xf]
      %v726 = vld [vmem:[%s707 + $0x48] sm:$0xf]
      %v727 = vld [vmem:[%s707 + $0x4c] sm:$0xf]
      %v728 = vld [vmem:[%s707 + $0x50] sm:$0xf]
      %v729 = vld [vmem:[%s707 + $0x54] sm:$0xf]
      %v730 = vld [vmem:[%s707 + $0x58] sm:$0xf]
      %v731 = vld [vmem:[%s707 + $0x5c] sm:$0xf]
      %v732 = vld [vmem:[%s707 + $0x60] sm:$0xf]
      %v733 = vld [vmem:[%s707 + $0x64] sm:$0xf]
      %v734 = vld [vmem:[%s707 + $0x68] sm:$0xf]
      %v735 = vld [vmem:[%s707 + $0x6c] sm:$0xf]
      %v736 = vld [vmem:[%s707 + $0x70] sm:$0xf]
      %v737 = vld [vmem:[%s707 + $0x74] sm:$0xf]
      %v738 = vld [vmem:[%s707 + $0x78] sm:$0xf]
      %v739 = vld [vmem:[%s707 + $0x7c] sm:$0xf]
      %v740 = vld [vmem:[%s707 + $0x80] sm:$0xf]
      %v741 = vld [vmem:[%s707 + $0x84] sm:$0xf]
      %v742 = vld [vmem:[%s707 + $0x88] sm:$0xf]
      %v743 = vld [vmem:[%s707 + $0x8c] sm:$0xf]
      %v744 = vld [vmem:[%s707 + $0x90] sm:$0xf]
      %v745 = vld [vmem:[%s707 + $0x94] sm:$0xf]
      %v746 = vld [vmem:[%s707 + $0x98] sm:$0xf]
      %v747 = vld [vmem:[%s707 + $0x9c] sm:$0xf]
      %v748 = vld [vmem:[%s707 + $0xa0] sm:$0xf]
      %v749 = vld [vmem:[%s707 + $0xa4] sm:$0xf]
      %v750 = vld [vmem:[%s707 + $0xa8] sm:$0xf]
      %v751 = vld [vmem:[%s707 + $0xac] sm:$0xf]
      %v752 = vld [vmem:[%s707 + $0xb0] sm:$0xf]
      %v753 = vld [vmem:[%s707 + $0xb4] sm:$0xf]
      %v754 = vld [vmem:[%s707 + $0xb8] sm:$0xf]
      %v755 = vld [vmem:[%s707 + $0xbc] sm:$0xf]
      %v756 = vld [vmem:[%s707 + $0xc0] sm:$0xf]
      %v757 = vld [vmem:[%s707 + $0xc4] sm:$0xf]
      %v758 = vld [vmem:[%s707 + $0xc8] sm:$0xf]
      %v759 = vld [vmem:[%s707 + $0xcc] sm:$0xf]
      %v760 = vld [vmem:[%s707 + $0xd0] sm:$0xf]
      %v761 = vld [vmem:[%s707 + $0xd4] sm:$0xf]
      %v762 = vld [vmem:[%s707 + $0xd8] sm:$0xf]
      %v763 = vld [vmem:[%s707 + $0xdc] sm:$0xf]
      %v764 = vld [vmem:[%s707 + $0xe0] sm:$0xf]
      %v765 = vld [vmem:[%s707 + $0xe4] sm:$0xf]
      %v766 = vld [vmem:[%s707 + $0xe8] sm:$0xf]
      %v767 = vld [vmem:[%s707 + $0xec] sm:$0xf]
      %v768 = vld [vmem:[%s707 + $0xf0] sm:$0xf]
      %v769 = vld [vmem:[%s707 + $0xf4] sm:$0xf]
      %v770 = vld [vmem:[%s707 + $0xf8] sm:$0xf]
      %v771 = vld [vmem:[%s707 + $0xfc] sm:$0xf]
      %v772 = vlaneseq
      %vm773 = vcmp.ge.s32.totalorder %v772, 0
      %vm774 = vcmp.lt.s32.totalorder %v772, 512
      %vm775 = vmand %vm773, %vm774
      %776 = vst.msk [vmem:[#allocation2] ss:$8 sm:$0xf] %vm775, 0.0
      %777 = vst.msk [vmem:[#allocation2] ss:$8 sm:$0x0] %vm775, 0.0
      %s778 = scalar_lea.vmem [#allocation2], 65
      %779 = vst.msk [vmem:[%s778] ss:$8 sm:$0xf] %vm775, 0.0
      %780 = vst.msk [vmem:[%s778] ss:$8 sm:$0x0] %vm775, 0.0
      %vm789 = vcmask 1040384
      %v790 = vrot.slane %v695, 7
      %v791 = vrot.slane %v696, 7
      %v792 = vrot.slane %v697, 7
      %v793 = vrot.slane %v698, 7
      %v794 = vrot.slane %v699, 7
      %v795 = vsel %vm789, %v790, %v794
      %v796 = vrot.slane %v700, 7
      %v797 = vsel %vm789, %v791, %v796
      %v798 = vrot.slane %v701, 7
      %v799 = vsel %vm789, %v792, %v798
      %v800 = vrot.slane %v702, 7
      %v801 = vsel %vm789, %v793, %v800
      %814 = vst [vmem:[#allocation2] sm:$0xfe] %v790
      %815 = vst [vmem:[#allocation2 + $0x8] sm:$0xfe] %v791
      %816 = vst [vmem:[#allocation2 + $0x10] sm:$0xfe] %v792
      %817 = vst [vmem:[#allocation2 + $0x18] sm:$0xfe] %v793
      %818 = vst [vmem:[#allocation2 + $0x20] sm:$0xff] %v795
      %819 = vst [vmem:[#allocation2 + $0x28] sm:$0xff] %v797
      %820 = vst [vmem:[#allocation2 + $0x30] sm:$0xff] %v799
      %821 = vst [vmem:[#allocation2 + $0x38] sm:$0xff] %v801
      %822 = vst [vmem:[#allocation2 + $0x40] sm:$0x1] %v794
      %823 = vst [vmem:[#allocation2 + $0x48] sm:$0x1] %v796
      %824 = vst [vmem:[#allocation2 + $0x50] sm:$0x1] %v798
      %825 = vst [vmem:[#allocation2 + $0x58] sm:$0x1] %v800
      %v826 = vld [vmem:[#allocation2] sm:$0xff]
      %v827 = vld [vmem:[#allocation2 + $0x8] sm:$0xff]
      %v828 = vld [vmem:[#allocation2 + $0x10] sm:$0xff]
      %v829 = vld [vmem:[#allocation2 + $0x18] sm:$0xff]
      %v830 = vld [vmem:[#allocation2 + $0x20] sm:$0xff]
      %v831 = vld [vmem:[#allocation2 + $0x28] sm:$0xff]
      %v832 = vld [vmem:[#allocation2 + $0x30] sm:$0xff]
      %v833 = vld [vmem:[#allocation2 + $0x38] sm:$0xff]
      %v834 = vpack.c.bf16 %v830, %v826
      %v835 = vpack.c.bf16 %v831, %v827
      %v836 = vpack.c.bf16 %v832, %v828
      %v837 = vpack.c.bf16 %v833, %v829
      %v838 = vld [vmem:[%s5] sm:$0xf]
      %v839 = vld [vmem:[%s5 + $0x4] sm:$0xf]
      %v840 = vld [vmem:[%s5 + $0x8] sm:$0xf]
      %v841 = vld [vmem:[%s5 + $0xc] sm:$0xf]
      %v842 = vld [vmem:[%s5 + $0x10] sm:$0xf]
      %v843 = vld [vmem:[%s5 + $0x14] sm:$0xf]
      %v844 = vld [vmem:[%s5 + $0x18] sm:$0xf]
      %v845 = vld [vmem:[%s5 + $0x1c] sm:$0xf]
      %v846 = vld [vmem:[%s5 + $0x20] sm:$0xf]
      %v847 = vld [vmem:[%s5 + $0x24] sm:$0xf]
      %v848 = vld [vmem:[%s5 + $0x28] sm:$0xf]
      %v849 = vld [vmem:[%s5 + $0x2c] sm:$0xf]
      %v850 = vld [vmem:[%s5 + $0x30] sm:$0xf]
      %v851 = vld [vmem:[%s5 + $0x34] sm:$0xf]
      %v852 = vld [vmem:[%s5 + $0x38] sm:$0xf]
      %v853 = vld [vmem:[%s5 + $0x3c] sm:$0xf]
      %v854 = vld [vmem:[%s5 + $0x40] sm:$0xf]
      %v855 = vld [vmem:[%s5 + $0x44] sm:$0xf]
      %v856 = vld [vmem:[%s5 + $0x48] sm:$0xf]
      %v857 = vld [vmem:[%s5 + $0x4c] sm:$0xf]
      %v858 = vld [vmem:[%s5 + $0x50] sm:$0xf]
      %v859 = vld [vmem:[%s5 + $0x54] sm:$0xf]
      %v860 = vld [vmem:[%s5 + $0x58] sm:$0xf]
      %v861 = vld [vmem:[%s5 + $0x5c] sm:$0xf]
      %v862 = vld [vmem:[%s5 + $0x60] sm:$0xf]
      %v863 = vld [vmem:[%s5 + $0x64] sm:$0xf]
      %v864 = vld [vmem:[%s5 + $0x68] sm:$0xf]
      %v865 = vld [vmem:[%s5 + $0x6c] sm:$0xf]
      %v866 = vld [vmem:[%s5 + $0x70] sm:$0xf]
      %v867 = vld [vmem:[%s5 + $0x74] sm:$0xf]
      %v868 = vld [vmem:[%s5 + $0x78] sm:$0xf]
      %v869 = vld [vmem:[%s5 + $0x7c] sm:$0xf]
      %v870 = vld [vmem:[%s5 + $0x80] sm:$0xf]
      %v871 = vld [vmem:[%s5 + $0x84] sm:$0xf]
      %v872 = vld [vmem:[%s5 + $0x88] sm:$0xf]
      %v873 = vld [vmem:[%s5 + $0x8c] sm:$0xf]
      %v874 = vld [vmem:[%s5 + $0x90] sm:$0xf]
      %v875 = vld [vmem:[%s5 + $0x94] sm:$0xf]
      %v876 = vld [vmem:[%s5 + $0x98] sm:$0xf]
      %v877 = vld [vmem:[%s5 + $0x9c] sm:$0xf]
      %v878 = vld [vmem:[%s5 + $0xa0] sm:$0xf]
      %v879 = vld [vmem:[%s5 + $0xa4] sm:$0xf]
      %v880 = vld [vmem:[%s5 + $0xa8] sm:$0xf]
      %v881 = vld [vmem:[%s5 + $0xac] sm:$0xf]
      %v882 = vld [vmem:[%s5 + $0xb0] sm:$0xf]
      %v883 = vld [vmem:[%s5 + $0xb4] sm:$0xf]
      %v884 = vld [vmem:[%s5 + $0xb8] sm:$0xf]
      %v885 = vld [vmem:[%s5 + $0xbc] sm:$0xf]
      %v886 = vld [vmem:[%s5 + $0xc0] sm:$0xf]
      %v887 = vld [vmem:[%s5 + $0xc4] sm:$0xf]
      %v888 = vld [vmem:[%s5 + $0xc8] sm:$0xf]
      %v889 = vld [vmem:[%s5 + $0xcc] sm:$0xf]
      %v890 = vld [vmem:[%s5 + $0xd0] sm:$0xf]
      %v891 = vld [vmem:[%s5 + $0xd4] sm:$0xf]
      %v892 = vld [vmem:[%s5 + $0xd8] sm:$0xf]
      %v893 = vld [vmem:[%s5 + $0xdc] sm:$0xf]
      %v894 = vld [vmem:[%s5 + $0xe0] sm:$0xf]
      %v895 = vld [vmem:[%s5 + $0xe4] sm:$0xf]
      %v896 = vld [vmem:[%s5 + $0xe8] sm:$0xf]
      %v897 = vld [vmem:[%s5 + $0xec] sm:$0xf]
      %v898 = vld [vmem:[%s5 + $0xf0] sm:$0xf]
      %v899 = vld [vmem:[%s5 + $0xf4] sm:$0xf]
      %v900 = vld [vmem:[%s5 + $0xf8] sm:$0xf]
      %v901 = vld [vmem:[%s5 + $0xfc] sm:$0xf]
      %v966 = vunpack.c.l.b16 %v838
      %v967 = vunpack.c.l.b16 %v839
      %v968 = vunpack.c.l.b16 %v840
      %v969 = vunpack.c.l.b16 %v841
      %v970 = vunpack.c.l.b16 %v842
      %v971 = vunpack.c.l.b16 %v843
      %v972 = vunpack.c.l.b16 %v844
      %v973 = vunpack.c.l.b16 %v845
      %v974 = vunpack.c.l.b16 %v846
      %v975 = vunpack.c.l.b16 %v847
      %v976 = vunpack.c.l.b16 %v848
      %v977 = vunpack.c.l.b16 %v849
      %v978 = vunpack.c.l.b16 %v850
      %v979 = vunpack.c.l.b16 %v851
      %v980 = vunpack.c.l.b16 %v852
      %v981 = vunpack.c.l.b16 %v853
      %v982 = vunpack.c.l.b16 %v854
      %v983 = vunpack.c.l.b16 %v855
      %v984 = vunpack.c.l.b16 %v856
      %v985 = vunpack.c.l.b16 %v857
      %v986 = vunpack.c.l.b16 %v858
      %v987 = vunpack.c.l.b16 %v859
      %v988 = vunpack.c.l.b16 %v860
      %v989 = vunpack.c.l.b16 %v861
      %v990 = vunpack.c.l.b16 %v862
      %v991 = vunpack.c.l.b16 %v863
      %v992 = vunpack.c.l.b16 %v864
      %v993 = vunpack.c.l.b16 %v865
      %v994 = vunpack.c.l.b16 %v866
      %v995 = vunpack.c.l.b16 %v867
      %v996 = vunpack.c.l.b16 %v868
      %v997 = vunpack.c.l.b16 %v869
      %v998 = vunpack.c.l.b16 %v870
      %v999 = vunpack.c.l.b16 %v871
      %v1000 = vunpack.c.l.b16 %v872
      %v1001 = vunpack.c.l.b16 %v873
      %v1002 = vunpack.c.l.b16 %v874
      %v1003 = vunpack.c.l.b16 %v875
      %v1004 = vunpack.c.l.b16 %v876
      %v1005 = vunpack.c.l.b16 %v877
      %v1006 = vunpack.c.l.b16 %v878
      %v1007 = vunpack.c.l.b16 %v879
      %v1008 = vunpack.c.l.b16 %v880
      %v1009 = vunpack.c.l.b16 %v881
      %v1010 = vunpack.c.l.b16 %v882
      %v1011 = vunpack.c.l.b16 %v883
      %v1012 = vunpack.c.l.b16 %v884
      %v1013 = vunpack.c.l.b16 %v885
      %v1014 = vunpack.c.l.b16 %v886
      %v1015 = vunpack.c.l.b16 %v887
      %v1016 = vunpack.c.l.b16 %v888
      %v1017 = vunpack.c.l.b16 %v889
      %v1018 = vunpack.c.l.b16 %v890
      %v1019 = vunpack.c.l.b16 %v891
      %v1020 = vunpack.c.l.b16 %v892
      %v1021 = vunpack.c.l.b16 %v893
      %v1022 = vunpack.c.l.b16 %v894
      %v1023 = vunpack.c.l.b16 %v895
      %v1024 = vunpack.c.l.b16 %v896
      %v1025 = vunpack.c.l.b16 %v897
      %v1026 = vunpack.c.l.b16 %v898
      %v1027 = vunpack.c.l.b16 %v899
      %v1028 = vunpack.c.l.b16 %v900
      %v1029 = vunpack.c.l.b16 %v901
      %v1030 = vpack.c.b16 %v967, %v966
      %v1031 = vpack.c.b16 %v969, %v968
      %v1032 = vpack.c.b16 %v971, %v970
      %v1033 = vpack.c.b16 %v973, %v972
      %v1034 = vpack.c.b16 %v975, %v974
      %v1035 = vpack.c.b16 %v977, %v976
      %v1036 = vpack.c.b16 %v979, %v978
      %v1037 = vpack.c.b16 %v981, %v980
      %v1038 = vpack.c.b16 %v983, %v982
      %v1039 = vpack.c.b16 %v985, %v984
      %v1040 = vpack.c.b16 %v987, %v986
      %v1041 = vpack.c.b16 %v989, %v988
      %v1042 = vpack.c.b16 %v991, %v990
      %v1043 = vpack.c.b16 %v993, %v992
      %v1044 = vpack.c.b16 %v995, %v994
      %v1045 = vpack.c.b16 %v997, %v996
      %v1046 = vpack.c.b16 %v999, %v998
      %v1047 = vpack.c.b16 %v1001, %v1000
      %v1048 = vpack.c.b16 %v1003, %v1002
      %v1049 = vpack.c.b16 %v1005, %v1004
      %v1050 = vpack.c.b16 %v1007, %v1006
      %v1051 = vpack.c.b16 %v1009, %v1008
      %v1052 = vpack.c.b16 %v1011, %v1010
      %v1053 = vpack.c.b16 %v1013, %v1012
      %v1054 = vpack.c.b16 %v1015, %v1014
      %v1055 = vpack.c.b16 %v1017, %v1016
      %v1056 = vpack.c.b16 %v1019, %v1018
      %v1057 = vpack.c.b16 %v1021, %v1020
      %v1058 = vpack.c.b16 %v1023, %v1022
      %v1059 = vpack.c.b16 %v1025, %v1024
      %v1060 = vpack.c.b16 %v1027, %v1026
      %v1061 = vpack.c.b16 %v1029, %v1028
      %1094 = vmatprep.subr.bf16.mxu0 0
      %1095 = vmatpush1.bf16.msra.mxu0 %v1030
      %1096 = vmatprep.subr.bf16.mxu0 0
      %1097 = vmatpush1.bf16.msra.mxu0 %v1031
      %1098 = vmatprep.subr.bf16.mxu0 0
      %1099 = vmatpush1.bf16.msra.mxu0 %v1032
      %1100 = vmatprep.subr.bf16.mxu0 0
      %1101 = vmatpush1.bf16.msra.mxu0 %v1033
      %1102 = vmatprep.subr.bf16.mxu0 0
      %1103 = vmatpush1.bf16.msra.mxu0 %v1034
      %1104 = vmatprep.subr.bf16.mxu0 0
      %1105 = vmatpush1.bf16.msra.mxu0 %v1035
      %1106 = vmatprep.subr.bf16.mxu0 0
      %1107 = vmatpush1.bf16.msra.mxu0 %v1036
      %1108 = vmatprep.subr.bf16.mxu0 0
      %1109 = vmatpush1.bf16.msra.mxu0 %v1037
      %1110 = vmatprep.subr.bf16.mxu0 0
      %1111 = vmatpush1.bf16.msra.mxu0 %v1038
      %1112 = vmatprep.subr.bf16.mxu0 0
      %1113 = vmatpush1.bf16.msra.mxu0 %v1039
      %1114 = vmatprep.subr.bf16.mxu0 0
      %1115 = vmatpush1.bf16.msra.mxu0 %v1040
      %1116 = vmatprep.subr.bf16.mxu0 0
      %1117 = vmatpush1.bf16.msra.mxu0 %v1041
      %1118 = vmatprep.subr.bf16.mxu0 0
      %1119 = vmatpush1.bf16.msra.mxu0 %v1042
      %1120 = vmatprep.subr.bf16.mxu0 0
      %1121 = vmatpush1.bf16.msra.mxu0 %v1043
      %1122 = vmatprep.subr.bf16.mxu0 0
      %1123 = vmatpush1.bf16.msra.mxu0 %v1044
      %1124 = vmatprep.subr.bf16.mxu0 0
      %1125 = vmatpush1.bf16.msra.mxu0 %v1045
      %1126 = vmatprep.mubr.bf16.mxu0 %v835
      %1127 = vmatmul.mubr.bf16.gmra.mrb[0].mxu0 %v834
      %v1128 = vpop.f32.mrb[0].mxu0
      %v1129 = vadd.f32 0.0, %v1128
      %v1130 = vpop.f32.mrb[0].mxu0
      %v1131 = vpop.f32.mrb[0].mxu0
      %v1132 = vadd.f32 0.0, %v1131
      %v1133 = vpop.f32.mrb[0].mxu0
      %1134 = vdwg.mxu0
      %1135 = vmatprep.subr.bf16.mxu0 0
      %1136 = vmatpush1.bf16.msra.mxu0 %v1046
      %1137 = vmatprep.subr.bf16.mxu0 0
      %1138 = vmatpush1.bf16.msra.mxu0 %v1047
      %1139 = vmatprep.subr.bf16.mxu0 0
      %1140 = vmatpush1.bf16.msra.mxu0 %v1048
      %1141 = vmatprep.subr.bf16.mxu0 0
      %1142 = vmatpush1.bf16.msra.mxu0 %v1049
      %1143 = vmatprep.subr.bf16.mxu0 0
      %1144 = vmatpush1.bf16.msra.mxu0 %v1050
      %1145 = vmatprep.subr.bf16.mxu0 0
      %1146 = vmatpush1.bf16.msra.mxu0 %v1051
      %1147 = vmatprep.subr.bf16.mxu0 0
      %1148 = vmatpush1.bf16.msra.mxu0 %v1052
      %1149 = vmatprep.subr.bf16.mxu0 0
      %1150 = vmatpush1.bf16.msra.mxu0 %v1053
      %1151 = vmatprep.subr.bf16.mxu0 0
      %1152 = vmatpush1.bf16.msra.mxu0 %v1054
      %1153 = vmatprep.subr.bf16.mxu0 0
      %1154 = vmatpush1.bf16.msra.mxu0 %v1055
      %1155 = vmatprep.subr.bf16.mxu0 0
      %1156 = vmatpush1.bf16.msra.mxu0 %v1056
      %1157 = vmatprep.subr.bf16.mxu0 0
      %1158 = vmatpush1.bf16.msra.mxu0 %v1057
      %1159 = vmatprep.subr.bf16.mxu0 0
      %1160 = vmatpush1.bf16.msra.mxu0 %v1058
      %1161 = vmatprep.subr.bf16.mxu0 0
      %1162 = vmatpush1.bf16.msra.mxu0 %v1059
      %1163 = vmatprep.subr.bf16.mxu0 0
      %1164 = vmatpush1.bf16.msra.mxu0 %v1060
      %1165 = vmatprep.subr.bf16.mxu0 0
      %1166 = vmatpush1.bf16.msra.mxu0 %v1061
      %1167 = vmatprep.mubr.bf16.mxu0 %v837
      %1168 = vmatmul.mubr.bf16.gmra.mrb[0].mxu0 %v836
      %v1169 = vpop.f32.mrb[0].mxu0
      %v1170 = vadd.f32 %v1129, %v1169
      %v1171 = vpop.f32.mrb[0].mxu0
      %v1172 = vpop.f32.mrb[0].mxu0
      %v1173 = vadd.f32 %v1132, %v1172
      %v1174 = vpop.f32.mrb[0].mxu0
      %1175 = vdwg.mxu0
      %v1240 = vunpack.c.l.b16 %v708
      %v1241 = vunpack.c.l.b16 %v709
      %v1242 = vunpack.c.l.b16 %v710
      %v1243 = vunpack.c.l.b16 %v711
      %v1244 = vunpack.c.l.b16 %v712
      %v1245 = vunpack.c.l.b16 %v713
      %v1246 = vunpack.c.l.b16 %v714
      %v1247 = vunpack.c.l.b16 %v715
      %v1248 = vunpack.c.l.b16 %v716
      %v1249 = vunpack.c.l.b16 %v717
      %v1250 = vunpack.c.l.b16 %v718
      %v1251 = vunpack.c.l.b16 %v719
      %v1252 = vunpack.c.l.b16 %v720
      %v1253 = vunpack.c.l.b16 %v721
      %v1254 = vunpack.c.l.b16 %v722
      %v1255 = vunpack.c.l.b16 %v723
      %v1256 = vunpack.c.l.b16 %v724
      %v1257 = vunpack.c.l.b16 %v725
      %v1258 = vunpack.c.l.b16 %v726
      %v1259 = vunpack.c.l.b16 %v727
      %v1260 = vunpack.c.l.b16 %v728
      %v1261 = vunpack.c.l.b16 %v729
      %v1262 = vunpack.c.l.b16 %v730
      %v1263 = vunpack.c.l.b16 %v731
      %v1264 = vunpack.c.l.b16 %v732
      %v1265 = vunpack.c.l.b16 %v733
      %v1266 = vunpack.c.l.b16 %v734
      %v1267 = vunpack.c.l.b16 %v735
      %v1268 = vunpack.c.l.b16 %v736
      %v1269 = vunpack.c.l.b16 %v737
      %v1270 = vunpack.c.l.b16 %v738
      %v1271 = vunpack.c.l.b16 %v739
      %v1272 = vunpack.c.l.b16 %v740
      %v1273 = vunpack.c.l.b16 %v741
      %v1274 = vunpack.c.l.b16 %v742
      %v1275 = vunpack.c.l.b16 %v743
      %v1276 = vunpack.c.l.b16 %v744
      %v1277 = vunpack.c.l.b16 %v745
      %v1278 = vunpack.c.l.b16 %v746
      %v1279 = vunpack.c.l.b16 %v747
      %v1280 = vunpack.c.l.b16 %v748
      %v1281 = vunpack.c.l.b16 %v749
      %v1282 = vunpack.c.l.b16 %v750
      %v1283 = vunpack.c.l.b16 %v751
      %v1284 = vunpack.c.l.b16 %v752
      %v1285 = vunpack.c.l.b16 %v753
      %v1286 = vunpack.c.l.b16 %v754
      %v1287 = vunpack.c.l.b16 %v755
      %v1288 = vunpack.c.l.b16 %v756
      %v1289 = vunpack.c.l.b16 %v757
      %v1290 = vunpack.c.l.b16 %v758
      %v1291 = vunpack.c.l.b16 %v759
      %v1292 = vunpack.c.l.b16 %v760
      %v1293 = vunpack.c.l.b16 %v761
      %v1294 = vunpack.c.l.b16 %v762
      %v1295 = vunpack.c.l.b16 %v763
      %v1296 = vunpack.c.l.b16 %v764
      %v1297 = vunpack.c.l.b16 %v765
      %v1298 = vunpack.c.l.b16 %v766
      %v1299 = vunpack.c.l.b16 %v767
      %v1300 = vunpack.c.l.b16 %v768
      %v1301 = vunpack.c.l.b16 %v769
      %v1302 = vunpack.c.l.b16 %v770
      %v1303 = vunpack.c.l.b16 %v771
      %v1304 = vpack.c.b16 %v1241, %v1240
      %v1305 = vpack.c.b16 %v1243, %v1242
      %v1306 = vpack.c.b16 %v1245, %v1244
      %v1307 = vpack.c.b16 %v1247, %v1246
      %v1308 = vpack.c.b16 %v1249, %v1248
      %v1309 = vpack.c.b16 %v1251, %v1250
      %v1310 = vpack.c.b16 %v1253, %v1252
      %v1311 = vpack.c.b16 %v1255, %v1254
      %v1312 = vpack.c.b16 %v1257, %v1256
      %v1313 = vpack.c.b16 %v1259, %v1258
      %v1314 = vpack.c.b16 %v1261, %v1260
      %v1315 = vpack.c.b16 %v1263, %v1262
      %v1316 = vpack.c.b16 %v1265, %v1264
      %v1317 = vpack.c.b16 %v1267, %v1266
      %v1318 = vpack.c.b16 %v1269, %v1268
      %v1319 = vpack.c.b16 %v1271, %v1270
      %v1320 = vpack.c.b16 %v1273, %v1272
      %v1321 = vpack.c.b16 %v1275, %v1274
      %v1322 = vpack.c.b16 %v1277, %v1276
      %v1323 = vpack.c.b16 %v1279, %v1278
      %v1324 = vpack.c.b16 %v1281, %v1280
      %v1325 = vpack.c.b16 %v1283, %v1282
      %v1326 = vpack.c.b16 %v1285, %v1284
      %v1327 = vpack.c.b16 %v1287, %v1286
      %v1328 = vpack.c.b16 %v1289, %v1288
      %v1329 = vpack.c.b16 %v1291, %v1290
      %v1330 = vpack.c.b16 %v1293, %v1292
      %v1331 = vpack.c.b16 %v1295, %v1294
      %v1332 = vpack.c.b16 %v1297, %v1296
      %v1333 = vpack.c.b16 %v1299, %v1298
      %v1334 = vpack.c.b16 %v1301, %v1300
      %v1335 = vpack.c.b16 %v1303, %v1302
      %1368 = vmatprep.subr.bf16.mxu0 0
      %1369 = vmatpush1.bf16.msra.mxu0 %v1304
      %1370 = vmatprep.subr.bf16.mxu0 0
      %1371 = vmatpush1.bf16.msra.mxu0 %v1305
      %1372 = vmatprep.subr.bf16.mxu0 0
      %1373 = vmatpush1.bf16.msra.mxu0 %v1306
      %1374 = vmatprep.subr.bf16.mxu0 0
      %1375 = vmatpush1.bf16.msra.mxu0 %v1307
      %1376 = vmatprep.subr.bf16.mxu0 0
      %1377 = vmatpush1.bf16.msra.mxu0 %v1308
      %1378 = vmatprep.subr.bf16.mxu0 0
      %1379 = vmatpush1.bf16.msra.mxu0 %v1309
      %1380 = vmatprep.subr.bf16.mxu0 0
      %1381 = vmatpush1.bf16.msra.mxu0 %v1310
      %1382 = vmatprep.subr.bf16.mxu0 0
      %1383 = vmatpush1.bf16.msra.mxu0 %v1311
      %1384 = vmatprep.subr.bf16.mxu0 0
      %1385 = vmatpush1.bf16.msra.mxu0 %v1312
      %1386 = vmatprep.subr.bf16.mxu0 0
      %1387 = vmatpush1.bf16.msra.mxu0 %v1313
      %1388 = vmatprep.subr.bf16.mxu0 0
      %1389 = vmatpush1.bf16.msra.mxu0 %v1314
      %1390 = vmatprep.subr.bf16.mxu0 0
      %1391 = vmatpush1.bf16.msra.mxu0 %v1315
      %1392 = vmatprep.subr.bf16.mxu0 0
      %1393 = vmatpush1.bf16.msra.mxu0 %v1316
      %1394 = vmatprep.subr.bf16.mxu0 0
      %1395 = vmatpush1.bf16.msra.mxu0 %v1317
      %1396 = vmatprep.subr.bf16.mxu0 0
      %1397 = vmatpush1.bf16.msra.mxu0 %v1318
      %1398 = vmatprep.subr.bf16.mxu0 0
      %1399 = vmatpush1.bf16.msra.mxu0 %v1319
      %1400 = vmatprep.mubr.bf16.mxu0 %v704
      %1401 = vmatmul.mubr.bf16.gmra.mrb[0].mxu0 %v703
      %v1402 = vpop.f32.mrb[0].mxu0
      %v1403 = vadd.f32 %v1170, %v1402
      %v1404 = vpop.f32.mrb[0].mxu0
      %v1405 = vpop.f32.mrb[0].mxu0
      %v1406 = vadd.f32 %v1173, %v1405
      %v1407 = vpop.f32.mrb[0].mxu0
      %1408 = vdwg.mxu0
      %1409 = vmatprep.subr.bf16.mxu0 0
      %1410 = vmatpush1.bf16.msra.mxu0 %v1320
      %1411 = vmatprep.subr.bf16.mxu0 0
      %1412 = vmatpush1.bf16.msra.mxu0 %v1321
      %1413 = vmatprep.subr.bf16.mxu0 0
      %1414 = vmatpush1.bf16.msra.mxu0 %v1322
      %1415 = vmatprep.subr.bf16.mxu0 0
      %1416 = vmatpush1.bf16.msra.mxu0 %v1323
      %1417 = vmatprep.subr.bf16.mxu0 0
      %1418 = vmatpush1.bf16.msra.mxu0 %v1324
      %1419 = vmatprep.subr.bf16.mxu0 0
      %1420 = vmatpush1.bf16.msra.mxu0 %v1325
      %1421 = vmatprep.subr.bf16.mxu0 0
      %1422 = vmatpush1.bf16.msra.mxu0 %v1326
      %1423 = vmatprep.subr.bf16.mxu0 0
      %1424 = vmatpush1.bf16.msra.mxu0 %v1327
      %1425 = vmatprep.subr.bf16.mxu0 0
      %1426 = vmatpush1.bf16.msra.mxu0 %v1328
      %1427 = vmatprep.subr.bf16.mxu0 0
      %1428 = vmatpush1.bf16.msra.mxu0 %v1329
      %1429 = vmatprep.subr.bf16.mxu0 0
      %1430 = vmatpush1.bf16.msra.mxu0 %v1330
      %1431 = vmatprep.subr.bf16.mxu0 0
      %1432 = vmatpush1.bf16.msra.mxu0 %v1331
      %1433 = vmatprep.subr.bf16.mxu0 0
      %1434 = vmatpush1.bf16.msra.mxu0 %v1332
      %1435 = vmatprep.subr.bf16.mxu0 0
      %1436 = vmatpush1.bf16.msra.mxu0 %v1333
      %1437 = vmatprep.subr.bf16.mxu0 0
      %1438 = vmatpush1.bf16.msra.mxu0 %v1334
      %1439 = vmatprep.subr.bf16.mxu0 0
      %1440 = vmatpush1.bf16.msra.mxu0 %v1335
      %1441 = vmatprep.mubr.bf16.mxu0 %v706
      %1442 = vmatmul.mubr.bf16.gmra.mrb[0].mxu0 %v705
      %v1443 = vpop.f32.mrb[0].mxu0
      %v1444 = vadd.f32 %v1403, %v1443
      %v1445 = vpop.f32.mrb[0].mxu0
      %v1446 = vpop.f32.mrb[0].mxu0
      %v1447 = vadd.f32 %v1406, %v1446
      %v1448 = vpop.f32.mrb[0].mxu0
      %1449 = vdwg.mxu0
      %v1450 = vld [vmem:[#allocation2] sm:$0xfc]
      %v1451 = vld [vmem:[#allocation2 + $0x8] sm:$0xfc]
      %v1452 = vld [vmem:[#allocation2 + $0x10] sm:$0xfc]
      %v1453 = vld [vmem:[#allocation2 + $0x18] sm:$0xfc]
      %v1454 = vld [vmem:[#allocation2 + $0x20] sm:$0xff]
      %v1455 = vld [vmem:[#allocation2 + $0x28] sm:$0xff]
      %v1456 = vld [vmem:[#allocation2 + $0x30] sm:$0xff]
      %v1457 = vld [vmem:[#allocation2 + $0x38] sm:$0xff]
      %v1458 = vld [vmem:[#allocation2 + $0x40] sm:$0x3]
      %v1459 = vld [vmem:[#allocation2 + $0x48] sm:$0x3]
      %v1460 = vld [vmem:[#allocation2 + $0x50] sm:$0x3]
      %v1461 = vld [vmem:[#allocation2 + $0x58] sm:$0x3]
      %v1462 = vpack.c.bf16 %v1454, %v1450
      %v1463 = vpack.c.bf16 %v1455, %v1451
      %v1464 = vpack.c.bf16 %v1456, %v1452
      %v1465 = vpack.c.bf16 %v1457, %v1453
      %v1466 = vpack.c.bf16 %v1458, %v1458
      %v1467 = vpack.c.bf16 %v1459, %v1459
      %v1468 = vpack.c.bf16 %v1460, %v1460
      %v1469 = vpack.c.bf16 %v1461, %v1461
      %s1470 = scalar_lea.vmem %s5, 512
      %v1471 = vld [vmem:[%s1470] sm:$0xf]
      %v1472 = vld [vmem:[%s1470 + $0x4] sm:$0xf]
      %v1473 = vld [vmem:[%s1470 + $0x8] sm:$0xf]
      %v1474 = vld [vmem:[%s1470 + $0xc] sm:$0xf]
      %v1475 = vld [vmem:[%s1470 + $0x10] sm:$0xf]
      %v1476 = vld [vmem:[%s1470 + $0x14] sm:$0xf]
      %v1477 = vld [vmem:[%s1470 + $0x18] sm:$0xf]
      %v1478 = vld [vmem:[%s1470 + $0x1c] sm:$0xf]
      %v1479 = vld [vmem:[%s1470 + $0x20] sm:$0xf]
      %v1480 = vld [vmem:[%s1470 + $0x24] sm:$0xf]
      %v1481 = vld [vmem:[%s1470 + $0x28] sm:$0xf]
      %v1482 = vld [vmem:[%s1470 + $0x2c] sm:$0xf]
      %v1483 = vld [vmem:[%s1470 + $0x30] sm:$0xf]
      %v1484 = vld [vmem:[%s1470 + $0x34] sm:$0xf]
      %v1485 = vld [vmem:[%s1470 + $0x38] sm:$0xf]
      %v1486 = vld [vmem:[%s1470 + $0x3c] sm:$0xf]
      %v1487 = vld [vmem:[%s1470 + $0x40] sm:$0xf]
      %v1488 = vld [vmem:[%s1470 + $0x44] sm:$0xf]
      %v1489 = vld [vmem:[%s1470 + $0x48] sm:$0xf]
      %v1490 = vld [vmem:[%s1470 + $0x4c] sm:$0xf]
      %v1491 = vld [vmem:[%s1470 + $0x50] sm:$0xf]
      %v1492 = vld [vmem:[%s1470 + $0x54] sm:$0xf]
      %v1493 = vld [vmem:[%s1470 + $0x58] sm:$0xf]
      %v1494 = vld [vmem:[%s1470 + $0x5c] sm:$0xf]
      %v1495 = vld [vmem:[%s1470 + $0x60] sm:$0xf]
      %v1496 = vld [vmem:[%s1470 + $0x64] sm:$0xf]
      %v1497 = vld [vmem:[%s1470 + $0x68] sm:$0xf]
      %v1498 = vld [vmem:[%s1470 + $0x6c] sm:$0xf]
      %v1499 = vld [vmem:[%s1470 + $0x70] sm:$0xf]
      %v1500 = vld [vmem:[%s1470 + $0x74] sm:$0xf]
      %v1501 = vld [vmem:[%s1470 + $0x78] sm:$0xf]
      %v1502 = vld [vmem:[%s1470 + $0x7c] sm:$0xf]
      %v1503 = vld [vmem:[%s1470 + $0x80] sm:$0xf]
      %v1504 = vld [vmem:[%s1470 + $0x84] sm:$0xf]
      %v1505 = vld [vmem:[%s1470 + $0x88] sm:$0xf]
      %v1506 = vld [vmem:[%s1470 + $0x8c] sm:$0xf]
      %v1507 = vld [vmem:[%s1470 + $0x90] sm:$0xf]
      %v1508 = vld [vmem:[%s1470 + $0x94] sm:$0xf]
      %v1509 = vld [vmem:[%s1470 + $0x98] sm:$0xf]
      %v1510 = vld [vmem:[%s1470 + $0x9c] sm:$0xf]
      %v1511 = vld [vmem:[%s1470 + $0xa0] sm:$0xf]
      %v1512 = vld [vmem:[%s1470 + $0xa4] sm:$0xf]
      %v1513 = vld [vmem:[%s1470 + $0xa8] sm:$0xf]
      %v1514 = vld [vmem:[%s1470 + $0xac] sm:$0xf]
      %v1515 = vld [vmem:[%s1470 + $0xb0] sm:$0xf]
      %v1516 = vld [vmem:[%s1470 + $0xb4] sm:$0xf]
      %v1517 = vld [vmem:[%s1470 + $0xb8] sm:$0xf]
      %v1518 = vld [vmem:[%s1470 + $0xbc] sm:$0xf]
      %v1519 = vld [vmem:[%s1470 + $0xc0] sm:$0xf]
      %v1520 = vld [vmem:[%s1470 + $0xc4] sm:$0xf]
      %v1521 = vld [vmem:[%s1470 + $0xc8] sm:$0xf]
      %v1522 = vld [vmem:[%s1470 + $0xcc] sm:$0xf]
      %v1523 = vld [vmem:[%s1470 + $0xd0] sm:$0xf]
      %v1524 = vld [vmem:[%s1470 + $0xd4] sm:$0xf]
      %v1525 = vld [vmem:[%s1470 + $0xd8] sm:$0xf]
      %v1526 = vld [vmem:[%s1470 + $0xdc] sm:$0xf]
      %v1527 = vld [vmem:[%s1470 + $0xe0] sm:$0xf]
      %v1528 = vld [vmem:[%s1470 + $0xe4] sm:$0xf]
      %v1529 = vld [vmem:[%s1470 + $0xe8] sm:$0xf]
      %v1530 = vld [vmem:[%s1470 + $0xec] sm:$0xf]
      %v1531 = vld [vmem:[%s1470 + $0xf0] sm:$0xf]
      %v1532 = vld [vmem:[%s1470 + $0xf4] sm:$0xf]
      %v1533 = vld [vmem:[%s1470 + $0xf8] sm:$0xf]
      %v1534 = vld [vmem:[%s1470 + $0xfc] sm:$0xf]
      %vm1543 = vcmask 1046528
      %v1544 = vrot.slane %v1462, 1
      %v1545 = vrot.slane %v1466, 1
      %v1546 = vsel %vm1543, %v1544, %v1545
      %v1547 = vrot.slane %v1463, 1
      %v1548 = vrot.slane %v1467, 1
      %v1549 = vsel %vm1543, %v1547, %v1548
      %v1550 = vrot.slane %v1464, 1
      %v1551 = vrot.slane %v1468, 1
      %v1552 = vsel %vm1543, %v1550, %v1551
      %v1553 = vrot.slane %v1465, 1
      %v1554 = vrot.slane %v1469, 1
      %v1555 = vsel %vm1543, %v1553, %v1554
      %v1624 = vunpack.c.l.b16 %v1471
      %v1625 = vunpack.c.l.b16 %v1472
      %v1626 = vunpack.c.l.b16 %v1473
      %v1627 = vunpack.c.l.b16 %v1474
      %v1628 = vunpack.c.l.b16 %v1475
      %v1629 = vunpack.c.l.b16 %v1476
      %v1630 = vunpack.c.l.b16 %v1477
      %v1631 = vunpack.c.l.b16 %v1478
      %v1632 = vunpack.c.l.b16 %v1479
      %v1633 = vunpack.c.l.b16 %v1480
      %v1634 = vunpack.c.l.b16 %v1481
      %v1635 = vunpack.c.l.b16 %v1482
      %v1636 = vunpack.c.l.b16 %v1483
      %v1637 = vunpack.c.l.b16 %v1484
      %v1638 = vunpack.c.l.b16 %v1485
      %v1639 = vunpack.c.l.b16 %v1486
      %v1640 = vunpack.c.l.b16 %v1487
      %v1641 = vunpack.c.l.b16 %v1488
      %v1642 = vunpack.c.l.b16 %v1489
      %v1643 = vunpack.c.l.b16 %v1490
      %v1644 = vunpack.c.l.b16 %v1491
      %v1645 = vunpack.c.l.b16 %v1492
      %v1646 = vunpack.c.l.b16 %v1493
      %v1647 = vunpack.c.l.b16 %v1494
      %v1648 = vunpack.c.l.b16 %v1495
      %v1649 = vunpack.c.l.b16 %v1496
      %v1650 = vunpack.c.l.b16 %v1497
      %v1651 = vunpack.c.l.b16 %v1498
      %v1652 = vunpack.c.l.b16 %v1499
      %v1653 = vunpack.c.l.b16 %v1500
      %v1654 = vunpack.c.l.b16 %v1501
      %v1655 = vunpack.c.l.b16 %v1502
      %v1656 = vunpack.c.l.b16 %v1503
      %v1657 = vunpack.c.l.b16 %v1504
      %v1658 = vunpack.c.l.b16 %v1505
      %v1659 = vunpack.c.l.b16 %v1506
      %v1660 = vunpack.c.l.b16 %v1507
      %v1661 = vunpack.c.l.b16 %v1508
      %v1662 = vunpack.c.l.b16 %v1509
      %v1663 = vunpack.c.l.b16 %v1510
      %v1664 = vunpack.c.l.b16 %v1511
      %v1665 = vunpack.c.l.b16 %v1512
      %v1666 = vunpack.c.l.b16 %v1513
      %v1667 = vunpack.c.l.b16 %v1514
      %v1668 = vunpack.c.l.b16 %v1515
      %v1669 = vunpack.c.l.b16 %v1516
      %v1670 = vunpack.c.l.b16 %v1517
      %v1671 = vunpack.c.l.b16 %v1518
      %v1672 = vunpack.c.l.b16 %v1519
      %v1673 = vunpack.c.l.b16 %v1520
      %v1674 = vunpack.c.l.b16 %v1521
      %v1675 = vunpack.c.l.b16 %v1522
      %v1676 = vunpack.c.l.b16 %v1523
      %v1677 = vunpack.c.l.b16 %v1524
      %v1678 = vunpack.c.l.b16 %v1525
      %v1679 = vunpack.c.l.b16 %v1526
      %v1680 = vunpack.c.l.b16 %v1527
      %v1681 = vunpack.c.l.b16 %v1528
      %v1682 = vunpack.c.l.b16 %v1529
      %v1683 = vunpack.c.l.b16 %v1530
      %v1684 = vunpack.c.l.b16 %v1531
      %v1685 = vunpack.c.l.b16 %v1532
      %v1686 = vunpack.c.l.b16 %v1533
      %v1687 = vunpack.c.l.b16 %v1534
      %v1688 = vpack.c.b16 %v1625, %v1624
      %v1689 = vpack.c.b16 %v1627, %v1626
      %v1690 = vpack.c.b16 %v1629, %v1628
      %v1691 = vpack.c.b16 %v1631, %v1630
      %v1692 = vpack.c.b16 %v1633, %v1632
      %v1693 = vpack.c.b16 %v1635, %v1634
      %v1694 = vpack.c.b16 %v1637, %v1636
      %v1695 = vpack.c.b16 %v1639, %v1638
      %v1696 = vpack.c.b16 %v1641, %v1640
      %v1697 = vpack.c.b16 %v1643, %v1642
      %v1698 = vpack.c.b16 %v1645, %v1644
      %v1699 = vpack.c.b16 %v1647, %v1646
      %v1700 = vpack.c.b16 %v1649, %v1648
      %v1701 = vpack.c.b16 %v1651, %v1650
      %v1702 = vpack.c.b16 %v1653, %v1652
      %v1703 = vpack.c.b16 %v1655, %v1654
      %v1704 = vpack.c.b16 %v1657, %v1656
      %v1705 = vpack.c.b16 %v1659, %v1658
      %v1706 = vpack.c.b16 %v1661, %v1660
      %v1707 = vpack.c.b16 %v1663, %v1662
      %v1708 = vpack.c.b16 %v1665, %v1664
      %v1709 = vpack.c.b16 %v1667, %v1666
      %v1710 = vpack.c.b16 %v1669, %v1668
      %v1711 = vpack.c.b16 %v1671, %v1670
      %v1712 = vpack.c.b16 %v1673, %v1672
      %v1713 = vpack.c.b16 %v1675, %v1674
      %v1714 = vpack.c.b16 %v1677, %v1676
      %v1715 = vpack.c.b16 %v1679, %v1678
      %v1716 = vpack.c.b16 %v1681, %v1680
      %v1717 = vpack.c.b16 %v1683, %v1682
      %v1718 = vpack.c.b16 %v1685, %v1684
      %v1719 = vpack.c.b16 %v1687, %v1686
      %1752 = vmatprep.subr.bf16.mxu0 0
      %1753 = vmatpush1.bf16.msra.mxu0 %v1688
      %1754 = vmatprep.subr.bf16.mxu0 0
      %1755 = vmatpush1.bf16.msra.mxu0 %v1689
      %1756 = vmatprep.subr.bf16.mxu0 0
      %1757 = vmatpush1.bf16.msra.mxu0 %v1690
      %1758 = vmatprep.subr.bf16.mxu0 0
      %1759 = vmatpush1.bf16.msra.mxu0 %v1691
      %1760 = vmatprep.subr.bf16.mxu0 0
      %1761 = vmatpush1.bf16.msra.mxu0 %v1692
      %1762 = vmatprep.subr.bf16.mxu0 0
      %1763 = vmatpush1.bf16.msra.mxu0 %v1693
      %1764 = vmatprep.subr.bf16.mxu0 0
      %1765 = vmatpush1.bf16.msra.mxu0 %v1694
      %1766 = vmatprep.subr.bf16.mxu0 0
      %1767 = vmatpush1.bf16.msra.mxu0 %v1695
      %1768 = vmatprep.subr.bf16.mxu0 0
      %1769 = vmatpush1.bf16.msra.mxu0 %v1696
      %1770 = vmatprep.subr.bf16.mxu0 0
      %1771 = vmatpush1.bf16.msra.mxu0 %v1697
      %1772 = vmatprep.subr.bf16.mxu0 0
      %1773 = vmatpush1.bf16.msra.mxu0 %v1698
      %1774 = vmatprep.subr.bf16.mxu0 0
      %1775 = vmatpush1.bf16.msra.mxu0 %v1699
      %1776 = vmatprep.subr.bf16.mxu0 0
      %1777 = vmatpush1.bf16.msra.mxu0 %v1700
      %1778 = vmatprep.subr.bf16.mxu0 0
      %1779 = vmatpush1.bf16.msra.mxu0 %v1701
      %1780 = vmatprep.subr.bf16.mxu0 0
      %1781 = vmatpush1.bf16.msra.mxu0 %v1702
      %1782 = vmatprep.subr.bf16.mxu0 0
      %1783 = vmatpush1.bf16.msra.mxu0 %v1703
      %1784 = vmatprep.mubr.bf16.mxu0 %v1549
      %1785 = vmatmul.mubr.bf16.gmra.mrb[0].mxu0 %v1546
      %v1786 = vpop.f32.mrb[0].mxu0
      %v1787 = vadd.f32 0.0, %v1786
      %v1788 = vpop.f32.mrb[0].mxu0
      %v1789 = vpop.f32.mrb[0].mxu0
      %v1790 = vadd.f32 0.0, %v1789
      %v1791 = vpop.f32.mrb[0].mxu0
      %1792 = vdwg.mxu0
      %1793 = vmatprep.subr.bf16.mxu0 0
      %1794 = vmatpush1.bf16.msra.mxu0 %v1704
      %1795 = vmatprep.subr.bf16.mxu0 0
      %1796 = vmatpush1.bf16.msra.mxu0 %v1705
      %1797 = vmatprep.subr.bf16.mxu0 0
      %1798 = vmatpush1.bf16.msra.mxu0 %v1706
      %1799 = vmatprep.subr.bf16.mxu0 0
      %1800 = vmatpush1.bf16.msra.mxu0 %v1707
      %1801 = vmatprep.subr.bf16.mxu0 0
      %1802 = vmatpush1.bf16.msra.mxu0 %v1708
      %1803 = vmatprep.subr.bf16.mxu0 0
      %1804 = vmatpush1.bf16.msra.mxu0 %v1709
      %1805 = vmatprep.subr.bf16.mxu0 0
      %1806 = vmatpush1.bf16.msra.mxu0 %v1710
      %1807 = vmatprep.subr.bf16.mxu0 0
      %1808 = vmatpush1.bf16.msra.mxu0 %v1711
      %1809 = vmatprep.subr.bf16.mxu0 0
      %1810 = vmatpush1.bf16.msra.mxu0 %v1712
      %1811 = vmatprep.subr.bf16.mxu0 0
      %1812 = vmatpush1.bf16.msra.mxu0 %v1713
      %1813 = vmatprep.subr.bf16.mxu0 0
      %1814 = vmatpush1.bf16.msra.mxu0 %v1714
      %1815 = vmatprep.subr.bf16.mxu0 0
      %1816 = vmatpush1.bf16.msra.mxu0 %v1715
      %1817 = vmatprep.subr.bf16.mxu0 0
      %1818 = vmatpush1.bf16.msra.mxu0 %v1716
      %1819 = vmatprep.subr.bf16.mxu0 0
      %1820 = vmatpush1.bf16.msra.mxu0 %v1717
      %1821 = vmatprep.subr.bf16.mxu0 0
      %1822 = vmatpush1.bf16.msra.mxu0 %v1718
      %1823 = vmatprep.subr.bf16.mxu0 0
      %1824 = vmatpush1.bf16.msra.mxu0 %v1719
      %1825 = vmatprep.mubr.bf16.mxu0 %v1555
      %1826 = vmatmul.mubr.bf16.gmra.mrb[0].mxu0 %v1552
      %v1827 = vpop.f32.mrb[0].mxu0
      %v1828 = vadd.f32 %v1787, %v1827
      %v1829 = vpop.f32.mrb[0].mxu0
      %v1830 = vpop.f32.mrb[0].mxu0
      %v1831 = vadd.f32 %v1790, %v1830
      %v1832 = vpop.f32.mrb[0].mxu0
      %1833 = vdwg.mxu0
      %v1834 = vadd.f32 %v1444, %v1828
      %v1835 = vadd.f32 %v1447, %v1831
      %1836 = vst [vmem:[%s251] sm:$0xff] %v1834
      %1837 = vst [vmem:[%s251 + $0x8] sm:$0xff] %v1835
      %p1838 = scmp.lt.s32.totalorder %s17, 1
      %s1839 = scalar_select %p1838, %s17, 1
      %s1840 = smul.addr %s1839, 2
      %s1841 = smul.addr %s1840, 8
      %s1842 = scalar_lea.vmem %s6, %s1841
      // Predicated region
      $region45: #{dense_layer_forward.1} parent=43 // pred_check
        %p1843 = pneg %p166
      $region46: #{dense_layer_forward.1} parent=43 // pred_check_branch
        %1845 = sbr.rel (%p1843) target = $region48
      $region47: #{dense_layer_forward.1} parent=43 // pred_region
        _
      $region48: #{dense_layer_forward.1} parent=43 // pred_fallthru
        _
    $region44: #{dense_layer_forward.1} parent=5 // pred_fallthru
      _
    %p1846 = scmp.le.s32.totalorder 2, %s12
    // Predicated region
    $region49: #{dense_layer_forward.1} parent=5 // pred_check
      %p1847 = pneg %p1846
    $region50: #{dense_layer_forward.1} parent=5 // pred_check_branch
      %1849 = sbr.rel (%p1847) target = $region52
    $region51: #{dense_layer_forward.1} parent=5 // pred_region
      %s1850 = ssub.s32 %s12, 2
      // Predicated region
      $region53: #{dense_layer_forward.1} parent=51 // pred_check
        %p1851 = pneg %p172
      $region54: #{dense_layer_forward.1} parent=51 // pred_check_branch
        %1853 = sbr.rel (%p1851) target = $region56
      $region55: #{dense_layer_forward.1} parent=51 // pred_region
        %p1854 = scmp.lt.s32.totalorder %s18, 1
        %s1855 = scalar_select %p1854, %s18, 1
        %s1856 = smul.addr %s1855, 2
        %s1857 = smul.addr %s1856, 8
        %s1858 = scalar_lea.vmem %s6, %s1857
      $region56: #{dense_layer_forward.1} parent=51 // pred_fallthru
        _
    $region52: #{dense_layer_forward.1} parent=5 // pred_fallthru
      _
  $region6: #{dense_layer_forward.1} parent=0 // loop_footer
    %s16 = sadd.s32 1, %s12
  $region7: #{dense_layer_forward.1} parent=0 // loop_footer_branch
    %11 = sbr.rel target = $region3
  $region8: #{dense_layer_forward.1} parent=0 // loop_exit
    _

</llo_original>
